<compile_context>
chip_gen: v7x
topology: tpu7x:2x2x1
jax: 0.10.0
libtpu: 0.0.40
codegen_flags: <defaults>
</compile_context>

<pallas_src>
import functools

import numpy as np
import jax
import jax.numpy as jnp
from jax import lax
from jax.experimental import pallas as pl
from jax.experimental.pallas import tpu as pltpu


# ----------------------------- Pallas kernels ------------------------------

def _mm_bias_stats_kernel(x_ref, w_ref, b_ref, o_ref, sum_ref, sq_ref):
    """y = x @ w + b ; accumulate per-column sum / sum(y^2) into per-core slot."""
    @pl.when(pl.program_id(1) == 0)
    def _():
        sum_ref[...] = jnp.zeros(sum_ref.shape, sum_ref.dtype)
        sq_ref[...] = jnp.zeros(sq_ref.shape, sq_ref.dtype)

    y = jnp.dot(x_ref[...], w_ref[...], preferred_element_type=jnp.float32) + b_ref[...]
    o_ref[...] = y
    sum_ref[...] += jnp.sum(y, axis=0, keepdims=True)[None]
    sq_ref[...] += jnp.sum(y * y, axis=0, keepdims=True)[None]


def _affine_relu_mm_bias_stats_kernel(x_ref, sc_ref, sh_ref, w_ref, b_ref,
                                      o_ref, sum_ref, sq_ref):
    """y = relu(x*scale + shift) @ w + b ; accumulate BN stats of y."""
    @pl.when(pl.program_id(1) == 0)
    def _():
        sum_ref[...] = jnp.zeros(sum_ref.shape, sum_ref.dtype)
        sq_ref[...] = jnp.zeros(sq_ref.shape, sq_ref.dtype)

    a = jnp.maximum(x_ref[...] * sc_ref[...] + sh_ref[...], 0.0)
    y = jnp.dot(a, w_ref[...], preferred_element_type=jnp.float32) + b_ref[...]
    o_ref[...] = y
    sum_ref[...] += jnp.sum(y, axis=0, keepdims=True)[None]
    sq_ref[...] += jnp.sum(y * y, axis=0, keepdims=True)[None]


def _affine_relu_conv3_final_kernel(x_ref, sc_ref, sh_ref, w_ref, b_ref,
                                    o_ref, *, k, nsub):
    """BN2 apply + ReLU + conv3 (both heads in one dot) + sigmoids + DB step."""
    a = jnp.maximum(x_ref[...] * sc_ref[...] + sh_ref[...], 0.0)
    y = jnp.dot(a, w_ref[...], preferred_element_type=jnp.float32) + b_ref[...]
    s = jax.nn.sigmoid(y[:, :nsub])
    t = jax.nn.sigmoid(y[:, nsub:])
    bmap = jax.nn.sigmoid(k * (s - t))      # reciprocal(1 + exp(-k(x - y)))
    o_ref[...] = jnp.concatenate([s, t, bmap], axis=1)


# ----------------------------- pallas_call glue -----------------------------

def _pick_tm(rows, target):
    """Largest multiple-of-8 row tile <= target that divides rows (else rows)."""
    tm = (min(target, rows) // 8) * 8
    while tm >= 8:
        if rows % tm == 0:
            return tm
        tm -= 8
    return rows


def _num_core_slots(rows, want=2):
    """Split rows into `want` parallel slices when tiling stays mask-free."""
    if want > 1 and rows % want == 0 and (rows // want) % 8 == 0:
        return want
    return 1


def conv1_fused(x, w, b, tm_target=512):
    rows, K = x.shape
    _, Nc = w.shape
    ncores = _num_core_slots(rows)
    rpc = rows // ncores
    tm = _pick_tm(rpc, tm_target)
    steps = rpc // tm
    out_sd = jax.ShapeDtypeStruct((rows, Nc), jnp.float32)
    stat_sd = jax.ShapeDtypeStruct((ncores, 1, Nc), jnp.float32)
    y, s, ss = pl.pallas_call(
        _mm_bias_stats_kernel,
        out_shape=(out_sd, stat_sd, stat_sd),
        grid_spec=pltpu.PrefetchScalarGridSpec(
            num_scalar_prefetch=0,
            grid=(ncores, steps),
            in_specs=[
                pl.BlockSpec((tm, K), lambda c, i: (c * steps + i, 0)),
                pl.BlockSpec((K, Nc), lambda c, i: (0, 0)),
                pl.BlockSpec((1, Nc), lambda c, i: (0, 0)),
            ],
            out_specs=(
                pl.BlockSpec((tm, Nc), lambda c, i: (c * steps + i, 0)),
                pl.BlockSpec((1, 1, Nc), lambda c, i: (c, 0, 0)),
                pl.BlockSpec((1, 1, Nc), lambda c, i: (c, 0, 0)),
            ),
        ),
        compiler_params=pltpu.CompilerParams(
            dimension_semantics=("parallel", "arbitrary")),
    )(x, w, b.reshape(1, Nc))
    return y, s.sum(axis=0), ss.sum(axis=0)          # (rows, Nc), (1, Nc), (1, Nc)


def conv2_fused(x, scale, shift, w, b, tm_target=512):
    rows, K = x.shape
    _, Nc = w.shape
    ncores = _num_core_slots(rows)
    rpc = rows // ncores
    tm = _pick_tm(rpc, tm_target)
    steps = rpc // tm
    out_sd = jax.ShapeDtypeStruct((rows, Nc), jnp.float32)
    stat_sd = jax.ShapeDtypeStruct((ncores, 1, Nc), jnp.float32)
    y, s, ss = pl.pallas_call(
        _affine_relu_mm_bias_stats_kernel,
        out_shape=(out_sd, stat_sd, stat_sd),
        grid_spec=pltpu.PrefetchScalarGridSpec(
            num_scalar_prefetch=0,
            grid=(ncores, steps),
            in_specs=[
                pl.BlockSpec((tm, K), lambda c, i: (c * steps + i, 0)),
                pl.BlockSpec((1, K), lambda c, i: (0, 0)),
                pl.BlockSpec((1, K), lambda c, i: (0, 0)),
                pl.BlockSpec((K, Nc), lambda c, i: (0, 0)),
                pl.BlockSpec((1, Nc), lambda c, i: (0, 0)),
            ],
            out_specs=(
                pl.BlockSpec((tm, Nc), lambda c, i: (c * steps + i, 0)),
                pl.BlockSpec((1, 1, Nc), lambda c, i: (c, 0, 0)),
                pl.BlockSpec((1, 1, Nc), lambda c, i: (c, 0, 0)),
            ),
        ),
        compiler_params=pltpu.CompilerParams(
            dimension_semantics=("parallel", "arbitrary")),
    )(x, scale, shift, w, b.reshape(1, Nc))
    return y, s.sum(axis=0), ss.sum(axis=0)


def conv3_final_fused(x, scale, shift, w3, b3, k, tm_target=512):
    rows, K = x.shape
    _, Nc2 = w3.shape            # 2 heads * 16 subpixel columns
    nsub = Nc2 // 2
    No = 3 * nsub                # shrink | thresh | binary, lane-contiguous
    tm = _pick_tm(rows, tm_target)
    out_sd = jax.ShapeDtypeStruct((rows, No), jnp.float32)
    return pl.pallas_call(
        functools.partial(_affine_relu_conv3_final_kernel, k=float(k), nsub=nsub),
        out_shape=out_sd,
        grid_spec=pltpu.PrefetchScalarGridSpec(
            num_scalar_prefetch=0,
            grid=(rows // tm,),
            in_specs=[
                pl.BlockSpec((tm, K), lambda i: (i, 0)),
                pl.BlockSpec((1, K), lambda i: (0, 0)),
                pl.BlockSpec((1, K), lambda i: (0, 0)),
                pl.BlockSpec((K, Nc2), lambda i: (0, 0)),
                pl.BlockSpec((1, Nc2), lambda i: (0, 0)),
            ],
            out_specs=pl.BlockSpec((tm, No), lambda i: (i, 0)),
        ),
        compiler_params=pltpu.CompilerParams(dimension_semantics=("parallel",)),
    )(x, scale, shift, w3, b3.reshape(1, Nc2))


# ------------------------------- Head glue ---------------------------------

def _block_diag(blocks):
    r = sum(b.shape[0] for b in blocks)
    c = sum(b.shape[1] for b in blocks)
    out = jnp.zeros((r, c), jnp.float32)
    ro = co = 0
    for b in blocks:
        out = out.at[ro:ro + b.shape[0], co:co + b.shape[1]].set(b)
        ro += b.shape[0]
        co += b.shape[1]
    return out


def db_head_forward(x_nchw, pb, pt, k=50.0, tm_target=512):
    """DBHead.forward (training mode): returns {'maps': [N, 3, 4H, 4W]}."""
    x = jnp.transpose(x_nchw, (0, 2, 3, 1)).astype(jnp.float32)   # NHWC
    N, H, W, Cin = x.shape
    Cmid = Cin // 4
    rows = N * H * W
    eps = 1e-5

    # ---- conv1 for BOTH heads: im2col built once, merged weights. ----
    # TODO(synk): fuse this im2col into the conv1 kernel via halo DMA.
    xp = jnp.pad(x, ((0, 0), (1, 1), (1, 1), (0, 0)))
    patches = jnp.stack(
        [xp[:, ky:ky + H, kx:kx + W, :] for ky in range(3) for kx in range(3)],
        axis=3,
    ).reshape(rows, 9 * Cin)

    def w1_mat(p):  # Conv2d weight (oc, ic, kh, kw) -> (kh*kw*ic, oc)
        return p["w1_t"].transpose(2, 3, 1, 0).reshape(9 * Cin, Cmid)

    W1 = jnp.concatenate([w1_mat(pb), w1_mat(pt)], axis=1)         # (9Cin, 2Cmid)
    B1 = jnp.concatenate([pb["b1"], pt["b1"]])

    y1, s1, ss1 = conv1_fused(patches, W1, B1, tm_target)          # (rows, 2Cmid)

    # BN1 affine from fused batch stats (training semantics, biased variance).
    n1 = float(rows)
    mean1 = s1 / n1
    var1 = ss1 / n1 - mean1 * mean1
    g1 = jnp.concatenate([pb["g1"], pt["g1"]]).reshape(1, -1)
    be1 = jnp.concatenate([pb["be1"], pt["be1"]]).reshape(1, -1)
    scale1 = g1 / jnp.sqrt(var1 + eps)
    shift1 = be1 - mean1 * scale1

    # ---- conv2 (ConvT 2x2/s2) as per-subpixel 1x1 matmul, both heads. ----
    # Output column layout: (head, kh, kw, oc).
    def w2_mat(p):  # ConvT weight (ic, oc, kh, kw) -> (ic, kh*kw*oc)
        return p["w2_t"].transpose(0, 2, 3, 1).reshape(Cmid, 4 * Cmid)

    W2 = _block_diag([w2_mat(pb), w2_mat(pt)])                     # (2Cmid, 8Cmid)
    B2 = jnp.concatenate([jnp.tile(pb["b2"], 4), jnp.tile(pt["b2"], 4)])

    y2, s2, ss2 = conv2_fused(y1, scale1, shift1, W2, B2, tm_target)  # (rows, 8Cmid)

    # BN2: fold the 4 subpixel columns into per-(head, channel) stats.
    n2 = float(rows * 4)
    s2f = s2.reshape(2, 4, Cmid).sum(axis=1)                       # (2, Cmid)
    ss2f = ss2.reshape(2, 4, Cmid).sum(axis=1)
    mean2 = s2f / n2
    var2 = ss2f / n2 - mean2 * mean2
    g2 = jnp.stack([pb["g2"], pt["g2"]])
    be2 = jnp.stack([pb["be2"], pt["be2"]])
    scale2 = g2 / jnp.sqrt(var2 + eps)
    shift2 = be2 - mean2 * scale2
    scale2c = jnp.broadcast_to(scale2[:, None, :], (2, 4, Cmid)).reshape(1, 8 * Cmid)
    shift2c = jnp.broadcast_to(shift2[:, None, :], (2, 4, Cmid)).reshape(1, 8 * Cmid)

    # ---- conv3 (ConvT 2x2/s2 -> 1ch) applied directly on subpixel columns,
    # fused with BN2 apply + ReLU + sigmoids + DB step, single block-diag dot.
    # Per head: input col groups (kh, kw, c) -> output cols (kh, kw, kh', kw').
    def w3_mat(p):  # (ic, 1, kh', kw') -> (ic, 4)
        return p["w3_t"].transpose(0, 2, 3, 1).reshape(Cmid, 4)

    W3 = _block_diag([_block_diag([w3_mat(pb)] * 4),
                      _block_diag([w3_mat(pt)] * 4)])              # (8Cmid, 32)
    B3 = jnp.concatenate([jnp.tile(pb["b3"], 16), jnp.tile(pt["b3"], 16)])

    out = conv3_final_fused(y2, scale2c, shift2c, W3, B3, k, tm_target)  # (rows, 48)

    # ---- final subpixel rearrangement to NCHW maps (single transpose). ----
    # Column layout of `out`: (map, kh, kw, kh', kw') with map = s|t|binary.
    maps = (out.reshape(N, H, W, 3, 2, 2, 2, 2)
               .transpose(0, 3, 1, 4, 6, 2, 5, 7)
               .reshape(N, 3, 4 * H, 4 * W))
    return {"maps": maps}


# --------------------------- parameters & reference ------------------------

def make_head_params(key, Cin):
    Cmid = Cin // 4
    k1, k2, k3, k4, k5 = jax.random.split(key, 5)
    return dict(
        w1_t=jax.random.normal(k1, (Cmid, Cin, 3, 3), jnp.float32) * 0.1,
        b1=jnp.zeros((Cmid,), jnp.float32),                 # nn.init.zeros_
        g1=jnp.ones((Cmid,), jnp.float32),                  # BN gamma = 1
        be1=jnp.zeros((Cmid,), jnp.float32),                # BN beta = 0
        w2_t=jax.random.normal(k2, (Cmid, Cmid, 2, 2), jnp.float32) * 0.2,
        b2=jax.random.normal(k3, (Cmid,), jnp.float32) * 0.05,
        g2=jnp.ones((Cmid,), jnp.float32),
        be2=jnp.zeros((Cmid,), jnp.float32),
        w3_t=jax.random.normal(k4, (Cmid, 1, 2, 2), jnp.float32) * 0.2,
        b3=jax.random.normal(k5, (1,), jnp.float32) * 0.05,
    )


def _ref_head(x_nchw, p):
    eps = 1e-5

    def bn(y, g, b):
        mean = y.mean(axis=(0, 2, 3), keepdims=True)
        var = y.var(axis=(0, 2, 3), keepdims=True)  # biased, torch BN training
        return (y - mean) / jnp.sqrt(var + eps) * g[None, :, None, None] \
               + b[None, :, None, None]

    y = lax.conv_general_dilated(
        x_nchw, p["w1_t"], (1, 1), ((1, 1), (1, 1)),
        dimension_numbers=("NCHW", "OIHW", "NCHW")) + p["b1"][None, :, None, None]
    y = jnp.maximum(bn(y, p["g1"], p["be1"]), 0.0)

    w2f = jnp.flip(p["w2_t"], axis=(2, 3)).transpose(1, 0, 2, 3)
    y = lax.conv_general_dilated(
        y, w2f, (1, 1), ((1, 1), (1, 1)), lhs_dilation=(2, 2),
        dimension_numbers=("NCHW", "OIHW", "NCHW")) + p["b2"][None, :, None, None]
    y = jnp.maximum(bn(y, p["g2"], p["be2"]), 0.0)

    w3f = jnp.flip(p["w3_t"], axis=(2, 3)).transpose(1, 0, 2, 3)
    y = lax.conv_general_dilated(
        y, w3f, (1, 1), ((1, 1), (1, 1)), lhs_dilation=(2, 2),
        dimension_numbers=("NCHW", "OIHW", "NCHW")) + p["b3"][None, :, None, None]
    return jax.nn.sigmoid(y)  # [N, 1, 4H, 4W]


def _ref_db_head(x_nchw, pb, pt, k=50.0):
    shrink = _ref_head(x_nchw, pb)
    thresh = _ref_head(x_nchw, pt)
    binary = jax.nn.sigmoid(k * (shrink - thresh))
    return jnp.concatenate([shrink, thresh, binary], axis=1)


# ---------------------------------- main ------------------------------------

if __name__ == "__main__":
    N, Cin, H, W = 2, 16, 16, 16   # small shapes; in_channels divisible by 4
    key = jax.random.PRNGKey(0)
    kx, kb, kt = jax.random.split(key, 3)

    x = jax.random.normal(kx, (N, Cin, H, W), jnp.float32)
    params_bin = make_head_params(kb, Cin)
    params_thr = make_head_params(kt, Cin)

    # tm_target=128 at this tiny test size so the stats kernels exercise both
    # the multi-step accumulation and the 2-slot core split; prod default 512.
    fwd = jax.jit(functools.partial(db_head_forward, k=50.0, tm_target=128))
    out = fwd(x, params_bin, params_thr)
    maps = jax.block_until_ready(out["maps"])
    assert maps.shape == (N, 3, 4 * H, 4 * W), maps.shape

    ref = jax.block_until_ready(_ref_db_head(x, params_bin, params_thr, k=50.0))
    np.testing.assert_allclose(np.asarray(maps), np.asarray(ref),
                               rtol=2e-4, atol=2e-4)
    print("KERNEL_OK")
</pallas_src>

<mosaic_0001>
module attributes {stable_mosaic.version = 11 : i64} {
  func.func @_mm_bias_stats_kernel(%arg0: i32, %arg1: i32, %arg2: memref<128x144xf32, #tpu.memory_space<vmem>>, %arg3: memref<144x8xf32, #tpu.memory_space<vmem>>, %arg4: memref<1x8xf32, #tpu.memory_space<vmem>>, %arg5: memref<128x8xf32, #tpu.memory_space<vmem>>, %arg6: memref<1x1x8xf32, #tpu.memory_space<vmem>>, %arg7: memref<1x1x8xf32, #tpu.memory_space<vmem>>) attributes {dimension_semantics = [#tpu.dimension_semantics<parallel>, #tpu.dimension_semantics<arbitrary>], iteration_bounds = array<i64: 2, 2>, scalar_prefetch = 0 : i64, scratch_operands = 0 : i64, tpu.core_type = #tpu.core_type<tc>, window_params = [{transform_indices = @transform_0, window_bounds = array<i64: 128, 144>}, {pipeline_mode = #tpu.pipeline_mode<synchronous>, transform_indices = @transform_1, window_bounds = array<i64: 144, 8>}, {pipeline_mode = #tpu.pipeline_mode<synchronous>, transform_indices = @transform_2, window_bounds = array<i64: 1, 8>}, {transform_indices = @transform_3, window_bounds = array<i64: 128, 8>}, {transform_indices = @transform_4, window_bounds = array<i64: 1, 1, 8>}, {transform_indices = @transform_5, window_bounds = array<i64: 1, 1, 8>}]} {
    %c0_i32 = arith.constant 0 : i32
    %0 = arith.cmpi eq, %arg1, %c0_i32 : i32
    %1 = arith.extui %0 : i1 to i32
    %c0_i32_0 = arith.constant 0 : i32
    %2 = arith.cmpi ne, %1, %c0_i32_0 : i32
    scf.if %2 {
      %cst_22 = arith.constant 0.000000e+00 : f32
      %23 = vector.broadcast %cst_22 : f32 to vector<1x1x8xf32>
      %c0_23 = arith.constant 0 : index
      %c0_24 = arith.constant 0 : index
      %c0_25 = arith.constant 0 : index
      %24 = vector.load %arg6[%c0_23, %c0_24, %c0_25] : memref<1x1x8xf32, #tpu.memory_space<vmem>>, vector<1x1x8xf32>
      tpu.vector_store %arg6[%c0_23, %c0_24, %c0_25], %23 {strides = array<i32>} : memref<1x1x8xf32, #tpu.memory_space<vmem>>, vector<1x1x8xf32>,
      %cst_26 = arith.constant 0.000000e+00 : f32
      %25 = vector.broadcast %cst_26 : f32 to vector<1x1x8xf32>
      %c0_27 = arith.constant 0 : index
      %c0_28 = arith.constant 0 : index
      %c0_29 = arith.constant 0 : index
      %26 = vector.load %arg7[%c0_27, %c0_28, %c0_29] : memref<1x1x8xf32, #tpu.memory_space<vmem>>, vector<1x1x8xf32>
      tpu.vector_store %arg7[%c0_27, %c0_28, %c0_29], %25 {strides = array<i32>} : memref<1x1x8xf32, #tpu.memory_space<vmem>>, vector<1x1x8xf32>,
    } else {
    }
    %c0 = arith.constant 0 : index
    %c0_1 = arith.constant 0 : index
    %3 = vector.load %arg2[%c0, %c0_1] : memref<128x144xf32, #tpu.memory_space<vmem>>, vector<128x144xf32>
    %c0_2 = arith.constant 0 : index
    %c0_3 = arith.constant 0 : index
    %4 = vector.load %arg3[%c0_2, %c0_3] : memref<144x8xf32, #tpu.memory_space<vmem>>, vector<144x8xf32>
    %cst = arith.constant dense<0.000000e+00> : vector<128x8xf32>
    %5 = tpu.matmul %3, %4, %cst {dimension_numbers = #tpu.dot_dimension_numbers<[1], [0], [0], [1], [0, 0, 1, 1], [], []>} : vector<128x144xf32>, vector<144x8xf32>, vector<128x8xf32> -> vector<128x8xf32>
    %c0_4 = arith.constant 0 : index
    %c0_5 = arith.constant 0 : index
    %6 = vector.load %arg4[%c0_4, %c0_5] : memref<1x8xf32, #tpu.memory_space<vmem>>, vector<1x8xf32>
    %7 = vector.broadcast %6 : vector<1x8xf32> to vector<128x8xf32>
    %8 = arith.addf %5, %7 : vector<128x8xf32>
    %c0_6 = arith.constant 0 : index
    %c0_7 = arith.constant 0 : index
    %9 = vector.load %arg5[%c0_6, %c0_7] : memref<128x8xf32, #tpu.memory_space<vmem>>, vector<128x8xf32>
    tpu.vector_store %arg5[%c0_6, %c0_7], %8 {strides = array<i32>} : memref<128x8xf32, #tpu.memory_space<vmem>>, vector<128x8xf32>,
    %c0_8 = arith.constant 0 : index
    %c0_9 = arith.constant 0 : index
    %c0_10 = arith.constant 0 : index
    %10 = vector.load %arg6[%c0_8, %c0_9, %c0_10] : memref<1x1x8xf32, #tpu.memory_space<vmem>>, vector<1x1x8xf32>
    %cst_11 = arith.constant dense<0.000000e+00> : vector<8xf32>
    %11 = vector.multi_reduction <add>, %8, %cst_11 [0] : vector<128x8xf32> to vector<8xf32>
    %12 = vector.shape_cast %11 : vector<8xf32> to vector<1x8xf32>
    %13 = vector.shape_cast %12 : vector<1x8xf32> to vector<1x1x8xf32>
    %14 = arith.addf %10, %13 : vector<1x1x8xf32>
    %c0_12 = arith.constant 0 : index
    %c0_13 = arith.constant 0 : index
    %c0_14 = arith.constant 0 : index
    %15 = vector.load %arg6[%c0_12, %c0_13, %c0_14] : memref<1x1x8xf32, #tpu.memory_space<vmem>>, vector<1x1x8xf32>
    tpu.vector_store %arg6[%c0_12, %c0_13, %c0_14], %14 {strides = array<i32>} : memref<1x1x8xf32, #tpu.memory_space<vmem>>, vector<1x1x8xf32>,
    %c0_15 = arith.constant 0 : index
    %c0_16 = arith.constant 0 : index
    %c0_17 = arith.constant 0 : index
    %16 = vector.load %arg7[%c0_15, %c0_16, %c0_17] : memref<1x1x8xf32, #tpu.memory_space<vmem>>, vector<1x1x8xf32>
    %17 = arith.mulf %8, %8 : vector<128x8xf32>
    %cst_18 = arith.constant dense<0.000000e+00> : vector<8xf32>
    %18 = vector.multi_reduction <add>, %17, %cst_18 [0] : vector<128x8xf32> to vector<8xf32>
    %19 = vector.shape_cast %18 : vector<8xf32> to vector<1x8xf32>
    %20 = vector.shape_cast %19 : vector<1x8xf32> to vector<1x1x8xf32>
    %21 = arith.addf %16, %20 : vector<1x1x8xf32>
    %c0_19 = arith.constant 0 : index
    %c0_20 = arith.constant 0 : index
    %c0_21 = arith.constant 0 : index
    %22 = vector.load %arg7[%c0_19, %c0_20, %c0_21] : memref<1x1x8xf32, #tpu.memory_space<vmem>>, vector<1x1x8xf32>
    tpu.vector_store %arg7[%c0_19, %c0_20, %c0_21], %21 {strides = array<i32>} : memref<1x1x8xf32, #tpu.memory_space<vmem>>, vector<1x1x8xf32>,
    return
  }
  func.func @transform_0(%arg0: i32, %arg1: i32) -> (i32, i32) {
    %c2_i32 = arith.constant 2 : i32
    %0 = arith.muli %arg0, %c2_i32 : i32
    %1 = arith.addi %0, %arg1 : i32
    %c0_i32 = arith.constant 0 : i32
    %c0_i32_0 = arith.constant 0 : i32
    return %1, %c0_i32 : i32, i32
  }
  func.func @transform_1(%arg0: i32, %arg1: i32) -> (i32, i32) {
    %c0_i32 = arith.constant 0 : i32
    %c0_i32_0 = arith.constant 0 : i32
    %c0_i32_1 = arith.constant 0 : i32
    return %c0_i32, %c0_i32_0 : i32, i32
  }
  func.func @transform_2(%arg0: i32, %arg1: i32) -> (i32, i32) {
    %c0_i32 = arith.constant 0 : i32
    %c0_i32_0 = arith.constant 0 : i32
    %c0_i32_1 = arith.constant 0 : i32
    return %c0_i32, %c0_i32_0 : i32, i32
  }
  func.func @transform_3(%arg0: i32, %arg1: i32) -> (i32, i32) {
    %c2_i32 = arith.constant 2 : i32
    %0 = arith.muli %arg0, %c2_i32 : i32
    %1 = arith.addi %0, %arg1 : i32
    %c0_i32 = arith.constant 0 : i32
    %c0_i32_0 = arith.constant 0 : i32
    return %1, %c0_i32 : i32, i32
  }
  func.func @transform_4(%arg0: i32, %arg1: i32) -> (i32, i32, i32) {
    %c0_i32 = arith.constant 0 : i32
    %c0_i32_0 = arith.constant 0 : i32
    %c0_i32_1 = arith.constant 0 : i32
    return %arg0, %c0_i32, %c0_i32_0 : i32, i32, i32
  }
  func.func @transform_5(%arg0: i32, %arg1: i32) -> (i32, i32, i32) {
    %c0_i32 = arith.constant 0 : i32
    %c0_i32_0 = arith.constant 0 : i32
    %c0_i32_1 = arith.constant 0 : i32
    return %arg0, %c0_i32, %c0_i32_0 : i32, i32, i32
  }
}

module attributes {stable_mosaic.version = 11 : i64} {
  func.func @_affine_relu_mm_bias_stats_kernel(%arg0: i32, %arg1: i32, %arg2: memref<128x8xf32, #tpu.memory_space<vmem>>, %arg3: memref<1x8xf32, #tpu.memory_space<vmem>>, %arg4: memref<1x8xf32, #tpu.memory_space<vmem>>, %arg5: memref<8x32xf32, #tpu.memory_space<vmem>>, %arg6: memref<1x32xf32, #tpu.memory_space<vmem>>, %arg7: memref<128x32xf32, #tpu.memory_space<vmem>>, %arg8: memref<1x1x32xf32, #tpu.memory_space<vmem>>, %arg9: memref<1x1x32xf32, #tpu.memory_space<vmem>>) attributes {dimension_semantics = [#tpu.dimension_semantics<parallel>, #tpu.dimension_semantics<arbitrary>], iteration_bounds = array<i64: 2, 2>, scalar_prefetch = 0 : i64, scratch_operands = 0 : i64, tpu.core_type = #tpu.core_type<tc>, window_params = [{transform_indices = @transform_0, window_bounds = array<i64: 128, 8>}, {pipeline_mode = #tpu.pipeline_mode<synchronous>, transform_indices = @transform_1, window_bounds = array<i64: 1, 8>}, {pipeline_mode = #tpu.pipeline_mode<synchronous>, transform_indices = @transform_2, window_bounds = array<i64: 1, 8>}, {pipeline_mode = #tpu.pipeline_mode<synchronous>, transform_indices = @transform_3, window_bounds = array<i64: 8, 32>}, {pipeline_mode = #tpu.pipeline_mode<synchronous>, transform_indices = @transform_4, window_bounds = array<i64: 1, 32>}, {transform_indices = @transform_5, window_bounds = array<i64: 128, 32>}, {transform_indices = @transform_6, window_bounds = array<i64: 1, 1, 32>}, {transform_indices = @transform_7, window_bounds = array<i64: 1, 1, 32>}]} {
    %c0_i32 = arith.constant 0 : i32
    %0 = arith.cmpi eq, %arg1, %c0_i32 : i32
    %1 = arith.extui %0 : i1 to i32
    %c0_i32_0 = arith.constant 0 : i32
    %2 = arith.cmpi ne, %1, %c0_i32_0 : i32
    scf.if %2 {
      %cst_27 = arith.constant 0.000000e+00 : f32
      %31 = vector.broadcast %cst_27 : f32 to vector<1x1x32xf32>
      %c0_28 = arith.constant 0 : index
      %c0_29 = arith.constant 0 : index
      %c0_30 = arith.constant 0 : index
      %32 = vector.load %arg8[%c0_28, %c0_29, %c0_30] : memref<1x1x32xf32, #tpu.memory_space<vmem>>, vector<1x1x32xf32>
      tpu.vector_store %arg8[%c0_28, %c0_29, %c0_30], %31 {strides = array<i32>} : memref<1x1x32xf32, #tpu.memory_space<vmem>>, vector<1x1x32xf32>,
      %cst_31 = arith.constant 0.000000e+00 : f32
      %33 = vector.broadcast %cst_31 : f32 to vector<1x1x32xf32>
      %c0_32 = arith.constant 0 : index
      %c0_33 = arith.constant 0 : index
      %c0_34 = arith.constant 0 : index
      %34 = vector.load %arg9[%c0_32, %c0_33, %c0_34] : memref<1x1x32xf32, #tpu.memory_space<vmem>>, vector<1x1x32xf32>
      tpu.vector_store %arg9[%c0_32, %c0_33, %c0_34], %33 {strides = array<i32>} : memref<1x1x32xf32, #tpu.memory_space<vmem>>, vector<1x1x32xf32>,
    } else {
    }
    %c0 = arith.constant 0 : index
    %c0_1 = arith.constant 0 : index
    %3 = vector.load %arg2[%c0, %c0_1] : memref<128x8xf32, #tpu.memory_space<vmem>>, vector<128x8xf32>
    %c0_2 = arith.constant 0 : index
    %c0_3 = arith.constant 0 : index
    %4 = vector.load %arg3[%c0_2, %c0_3] : memref<1x8xf32, #tpu.memory_space<vmem>>, vector<1x8xf32>
    %5 = vector.broadcast %4 : vector<1x8xf32> to vector<128x8xf32>
    %6 = arith.mulf %3, %5 : vector<128x8xf32>
    %c0_4 = arith.constant 0 : index
    %c0_5 = arith.constant 0 : index
    %7 = vector.load %arg4[%c0_4, %c0_5] : memref<1x8xf32, #tpu.memory_space<vmem>>, vector<1x8xf32>
    %8 = vector.broadcast %7 : vector<1x8xf32> to vector<128x8xf32>
    %9 = arith.addf %6, %8 : vector<128x8xf32>
    %cst = arith.constant 0.000000e+00 : f32
    %10 = vector.broadcast %cst : f32 to vector<128x8xf32>
    %11 = arith.maximumf %9, %10 : vector<128x8xf32>
    %c0_6 = arith.constant 0 : index
    %c0_7 = arith.constant 0 : index
    %12 = vector.load %arg5[%c0_6, %c0_7] : memref<8x32xf32, #tpu.memory_space<vmem>>, vector<8x32xf32>
    %cst_8 = arith.constant dense<0.000000e+00> : vector<128x32xf32>
    %13 = tpu.matmul %11, %12, %cst_8 {dimension_numbers = #tpu.dot_dimension_numbers<[1], [0], [0], [1], [0, 0, 1, 1], [], []>} : vector<128x8xf32>, vector<8x32xf32>, vector<128x32xf32> -> vector<128x32xf32>
    %c0_9 = arith.constant 0 : index
    %c0_10 = arith.constant 0 : index
    %14 = vector.load %arg6[%c0_9, %c0_10] : memref<1x32xf32, #tpu.memory_space<vmem>>, vector<1x32xf32>
    %15 = vector.broadcast %14 : vector<1x32xf32> to vector<128x32xf32>
    %16 = arith.addf %13, %15 : vector<128x32xf32>
    %c0_11 = arith.constant 0 : index
    %c0_12 = arith.constant 0 : index
    %17 = vector.load %arg7[%c0_11, %c0_12] : memref<128x32xf32, #tpu.memory_space<vmem>>, vector<128x32xf32>
    tpu.vector_store %arg7[%c0_11, %c0_12], %16 {strides = array<i32>} : memref<128x32xf32, #tpu.memory_space<vmem>>, vector<128x32xf32>,
    %c0_13 = arith.constant 0 : index
    %c0_14 = arith.constant 0 : index
    %c0_15 = arith.constant 0 : index
    %18 = vector.load %arg8[%c0_13, %c0_14, %c0_15] : memref<1x1x32xf32, #tpu.memory_space<vmem>>, vector<1x1x32xf32>
    %cst_16 = arith.constant dense<0.000000e+00> : vector<32xf32>
    %19 = vector.multi_reduction <add>, %16, %cst_16 [0] : vector<128x32xf32> to vector<32xf32>
    %20 = vector.shape_cast %19 : vector<32xf32> to vector<1x32xf32>
    %21 = vector.shape_cast %20 : vector<1x32xf32> to vector<1x1x32xf32>
    %22 = arith.addf %18, %21 : vector<1x1x32xf32>
    %c0_17 = arith.constant 0 : index
    %c0_18 = arith.constant 0 : index
    %c0_19 = arith.constant 0 : index
    %23 = vector.load %arg8[%c0_17, %c0_18, %c0_19] : memref<1x1x32xf32, #tpu.memory_space<vmem>>, vector<1x1x32xf32>
    tpu.vector_store %arg8[%c0_17, %c0_18, %c0_19], %22 {strides = array<i32>} : memref<1x1x32xf32, #tpu.memory_space<vmem>>, vector<1x1x32xf32>,
    %c0_20 = arith.constant 0 : index
    %c0_21 = arith.constant 0 : index
    %c0_22 = arith.constant 0 : index
    %24 = vector.load %arg9[%c0_20, %c0_21, %c0_22] : memref<1x1x32xf32, #tpu.memory_space<vmem>>, vector<1x1x32xf32>
    %25 = arith.mulf %16, %16 : vector<128x32xf32>
    %cst_23 = arith.constant dense<0.000000e+00> : vector<32xf32>
    %26 = vector.multi_reduction <add>, %25, %cst_23 [0] : vector<128x32xf32> to vector<32xf32>
    %27 = vector.shape_cast %26 : vector<32xf32> to vector<1x32xf32>
    %28 = vector.shape_cast %27 : vector<1x32xf32> to vector<1x1x32xf32>
    %29 = arith.addf %24, %28 : vector<1x1x32xf32>
    %c0_24 = arith.constant 0 : index
    %c0_25 = arith.constant 0 : index
    %c0_26 = arith.constant 0 : index
    %30 = vector.load %arg9[%c0_24, %c0_25, %c0_26] : memref<1x1x32xf32, #tpu.memory_space<vmem>>, vector<1x1x32xf32>
    tpu.vector_store %arg9[%c0_24, %c0_25, %c0_26], %29 {strides = array<i32>} : memref<1x1x32xf32, #tpu.memory_space<vmem>>, vector<1x1x32xf32>,
    return
  }
  func.func @transform_0(%arg0: i32, %arg1: i32) -> (i32, i32) {
    %c2_i32 = arith.constant 2 : i32
    %0 = arith.muli %arg0, %c2_i32 : i32
    %1 = arith.addi %0, %arg1 : i32
    %c0_i32 = arith.constant 0 : i32
    %c0_i32_0 = arith.constant 0 : i32
    return %1, %c0_i32 : i32, i32
  }
  func.func @transform_1(%arg0: i32, %arg1: i32) -> (i32, i32) {
    %c0_i32 = arith.constant 0 : i32
    %c0_i32_0 = arith.constant 0 : i32
    %c0_i32_1 = arith.constant 0 : i32
    return %c0_i32, %c0_i32_0 : i32, i32
  }
  func.func @transform_2(%arg0: i32, %arg1: i32) -> (i32, i32) {
    %c0_i32 = arith.constant 0 : i32
    %c0_i32_0 = arith.constant 0 : i32
    %c0_i32_1 = arith.constant 0 : i32
    return %c0_i32, %c0_i32_0 : i32, i32
  }
  func.func @transform_3(%arg0: i32, %arg1: i32) -> (i32, i32) {
    %c0_i32 = arith.constant 0 : i32
    %c0_i32_0 = arith.constant 0 : i32
    %c0_i32_1 = arith.constant 0 : i32
    return %c0_i32, %c0_i32_0 : i32, i32
  }
  func.func @transform_4(%arg0: i32, %arg1: i32) -> (i32, i32) {
    %c0_i32 = arith.constant 0 : i32
    %c0_i32_0 = arith.constant 0 : i32
    %c0_i32_1 = arith.constant 0 : i32
    return %c0_i32, %c0_i32_0 : i32, i32
  }
  func.func @transform_5(%arg0: i32, %arg1: i32) -> (i32, i32) {
    %c2_i32 = arith.constant 2 : i32
    %0 = arith.muli %arg0, %c2_i32 : i32
    %1 = arith.addi %0, %arg1 : i32
    %c0_i32 = arith.constant 0 : i32
    %c0_i32_0 = arith.constant 0 : i32
    return %1, %c0_i32 : i32, i32
  }
  func.func @transform_6(%arg0: i32, %arg1: i32) -> (i32, i32, i32) {
    %c0_i32 = arith.constant 0 : i32
    %c0_i32_0 = arith.constant 0 : i32
    %c0_i32_1 = arith.constant 0 : i32
    return %arg0, %c0_i32, %c0_i32_0 : i32, i32, i32
  }
  func.func @transform_7(%arg0: i32, %arg1: i32) -> (i32, i32, i32) {
    %c0_i32 = arith.constant 0 : i32
    %c0_i32_0 = arith.constant 0 : i32
    %c0_i32_1 = arith.constant 0 : i32
    return %arg0, %c0_i32, %c0_i32_0 : i32, i32, i32
  }
}

module attributes {stable_mosaic.version = 11 : i64} {
  func.func @_affine_relu_conv3_final_kernel(%arg0: i32, %arg1: memref<128x32xf32, #tpu.memory_space<vmem>>, %arg2: memref<1x32xf32, #tpu.memory_space<vmem>>, %arg3: memref<1x32xf32, #tpu.memory_space<vmem>>, %arg4: memref<32x32xf32, #tpu.memory_space<vmem>>, %arg5: memref<1x32xf32, #tpu.memory_space<vmem>>, %arg6: memref<128x48xf32, #tpu.memory_space<vmem>>) attributes {dimension_semantics = [#tpu.dimension_semantics<parallel>], iteration_bounds = array<i64: 4>, scalar_prefetch = 0 : i64, scratch_operands = 0 : i64, tpu.core_type = #tpu.core_type<tc>, window_params = [{transform_indices = @transform_0, window_bounds = array<i64: 128, 32>}, {pipeline_mode = #tpu.pipeline_mode<synchronous>, transform_indices = @transform_1, window_bounds = array<i64: 1, 32>}, {pipeline_mode = #tpu.pipeline_mode<synchronous>, transform_indices = @transform_2, window_bounds = array<i64: 1, 32>}, {pipeline_mode = #tpu.pipeline_mode<synchronous>, transform_indices = @transform_3, window_bounds = array<i64: 32, 32>}, {pipeline_mode = #tpu.pipeline_mode<synchronous>, transform_indices = @transform_4, window_bounds = array<i64: 1, 32>}, {transform_indices = @transform_5, window_bounds = array<i64: 128, 48>}]} {
    %c0 = arith.constant 0 : index
    %c0_0 = arith.constant 0 : index
    %0 = vector.load %arg1[%c0, %c0_0] : memref<128x32xf32, #tpu.memory_space<vmem>>, vector<128x32xf32>
    %c0_1 = arith.constant 0 : index
    %c0_2 = arith.constant 0 : index
    %1 = vector.load %arg2[%c0_1, %c0_2] : memref<1x32xf32, #tpu.memory_space<vmem>>, vector<1x32xf32>
    %2 = vector.broadcast %1 : vector<1x32xf32> to vector<128x32xf32>
    %3 = arith.mulf %0, %2 : vector<128x32xf32>
    %c0_3 = arith.constant 0 : index
    %c0_4 = arith.constant 0 : index
    %4 = vector.load %arg3[%c0_3, %c0_4] : memref<1x32xf32, #tpu.memory_space<vmem>>, vector<1x32xf32>
    %5 = vector.broadcast %4 : vector<1x32xf32> to vector<128x32xf32>
    %6 = arith.addf %3, %5 : vector<128x32xf32>
    %cst = arith.constant 0.000000e+00 : f32
    %7 = vector.broadcast %cst : f32 to vector<128x32xf32>
    %8 = arith.maximumf %6, %7 : vector<128x32xf32>
    %c0_5 = arith.constant 0 : index
    %c0_6 = arith.constant 0 : index
    %9 = vector.load %arg4[%c0_5, %c0_6] : memref<32x32xf32, #tpu.memory_space<vmem>>, vector<32x32xf32>
    %cst_7 = arith.constant dense<0.000000e+00> : vector<128x32xf32>
    %10 = tpu.matmul %8, %9, %cst_7 {dimension_numbers = #tpu.dot_dimension_numbers<[1], [0], [0], [1], [0, 0, 1, 1], [], []>} : vector<128x32xf32>, vector<32x32xf32>, vector<128x32xf32> -> vector<128x32xf32>
    %c0_8 = arith.constant 0 : index
    %c0_9 = arith.constant 0 : index
    %11 = vector.load %arg5[%c0_8, %c0_9] : memref<1x32xf32, #tpu.memory_space<vmem>>, vector<1x32xf32>
    %12 = vector.broadcast %11 : vector<1x32xf32> to vector<128x32xf32>
    %13 = arith.addf %10, %12 : vector<128x32xf32>
    %14 = vector.extract_strided_slice %13 {offsets = [0, 0], sizes = [128, 16], strides = [1, 1]} : vector<128x32xf32> to vector<128x16xf32>
    %15 = arith.negf %14 : vector<128x16xf32>
    %16 = math.exp %15 : vector<128x16xf32>
    %cst_10 = arith.constant 1.000000e+00 : f32
    %17 = vector.broadcast %cst_10 : f32 to vector<128x16xf32>
    %18 = arith.addf %17, %16 : vector<128x16xf32>
    %19 = arith.divf %17, %18 : vector<128x16xf32>
    %20 = vector.extract_strided_slice %13 {offsets = [0, 16], sizes = [128, 16], strides = [1, 1]} : vector<128x32xf32> to vector<128x16xf32>
    %21 = arith.negf %20 : vector<128x16xf32>
    %22 = math.exp %21 : vector<128x16xf32>
    %cst_11 = arith.constant 1.000000e+00 : f32
    %23 = vector.broadcast %cst_11 : f32 to vector<128x16xf32>
    %24 = arith.addf %23, %22 : vector<128x16xf32>
    %25 = arith.divf %23, %24 : vector<128x16xf32>
    %26 = arith.subf %19, %25 : vector<128x16xf32>
    %cst_12 = arith.constant 5.000000e+01 : f32
    %27 = vector.broadcast %cst_12 : f32 to vector<128x16xf32>
    %28 = arith.mulf %27, %26 : vector<128x16xf32>
    %29 = arith.negf %28 : vector<128x16xf32>
    %30 = math.exp %29 : vector<128x16xf32>
    %cst_13 = arith.constant 1.000000e+00 : f32
    %31 = vector.broadcast %cst_13 : f32 to vector<128x16xf32>
    %32 = arith.addf %31, %30 : vector<128x16xf32>
    %33 = arith.divf %31, %32 : vector<128x16xf32>
    %34 = tpu.concatenate %19, %25, %33 in 1 : vector<128x16xf32>, vector<128x16xf32>, vector<128x16xf32> -> vector<128x48xf32>
    %c0_14 = arith.constant 0 : index
    %c0_15 = arith.constant 0 : index
    %35 = vector.load %arg6[%c0_14, %c0_15] : memref<128x48xf32, #tpu.memory_space<vmem>>, vector<128x48xf32>
    tpu.vector_store %arg6[%c0_14, %c0_15], %34 {strides = array<i32>} : memref<128x48xf32, #tpu.memory_space<vmem>>, vector<128x48xf32>,
    return
  }
  func.func @transform_0(%arg0: i32) -> (i32, i32) {
    %c0_i32 = arith.constant 0 : i32
    %c0_i32_0 = arith.constant 0 : i32
    return %arg0, %c0_i32 : i32, i32
  }
  func.func @transform_1(%arg0: i32) -> (i32, i32) {
    %c0_i32 = arith.constant 0 : i32
    %c0_i32_0 = arith.constant 0 : i32
    %c0_i32_1 = arith.constant 0 : i32
    return %c0_i32, %c0_i32_0 : i32, i32
  }
  func.func @transform_2(%arg0: i32) -> (i32, i32) {
    %c0_i32 = arith.constant 0 : i32
    %c0_i32_0 = arith.constant 0 : i32
    %c0_i32_1 = arith.constant 0 : i32
    return %c0_i32, %c0_i32_0 : i32, i32
  }
  func.func @transform_3(%arg0: i32) -> (i32, i32) {
    %c0_i32 = arith.constant 0 : i32
    %c0_i32_0 = arith.constant 0 : i32
    %c0_i32_1 = arith.constant 0 : i32
    return %c0_i32, %c0_i32_0 : i32, i32
  }
  func.func @transform_4(%arg0: i32) -> (i32, i32) {
    %c0_i32 = arith.constant 0 : i32
    %c0_i32_0 = arith.constant 0 : i32
    %c0_i32_1 = arith.constant 0 : i32
    return %c0_i32, %c0_i32_0 : i32, i32
  }
  func.func @transform_5(%arg0: i32) -> (i32, i32) {
    %c0_i32 = arith.constant 0 : i32
    %c0_i32_0 = arith.constant 0 : i32
    return %arg0, %c0_i32 : i32, i32
  }
}

</mosaic_0001>

<llo_original>
// kernel: tile.23
$region0: #{tile.23}
  #allocation2 [shape = 's32[1]{0}', space=sflag, size = 0x4, scoped, tag = 'scoped memory for tile.23']
  %s0 = inlined_call_operand.hbm [shape: f32[4], index: 0, kind: input, shape index: {}]
  %s1 = inlined_call_operand.vmem [shape: f32[4,4], index: 1, kind: output, shape index: {}]
  $region1: #{tile.23} parent=0
    #allocation0 [shape = 'u8[512]{0}', space=vmem, size = 0x400, scoped, tag = 'operand span for operand 0']
    #allocation1 [shape = 's32[1]{0}', space=sflag, size = 0x4, scoped, tag = 'scoped memory for tile.23']
    %2 = vsyncpa [#allocation1], 0
    // Predicated region
    $region2: #{tile.23} parent=1 // pred_check
      _
    $region3: #{tile.23} parent=1 // pred_check_branch
      %4 = sbr.rel (0) target = $region5
    $region4: #{tile.23} parent=1 // pred_region
      %s6 = ssub.s32 16, 16
      %7 = vsyncadd [#allocation1], %s6
      %s9 = sshll.u32 [#allocation0], 4
      %s10 = int_to_ptr.vmem [resolvable:$true] %s9
      %12 = dma.hbm_to_vmem [thread:$0]  %s0, 16, %s10, [#allocation1]
    $region5: #{tile.23} parent=1 // pred_fallthru
      _
    // Predicated region
    $region6: #{tile.23} parent=1 // pred_check
      _
    $region7: #{tile.23} parent=1 // pred_check_branch
      %14 = sbr.rel (0) target = $region9
    $region8: #{tile.23} parent=1 // pred_region
      %15 = dma.done [#allocation1], 16
    $region9: #{tile.23} parent=1 // pred_fallthru
      _
    %v16 = vld [vmem:[#allocation0] ss:$0 sm:$0xff]
    %17 = vst [vmem:[%s1] sm:$0xf] %v16
    %18 = vsyncpa [#allocation1], 1

// kernel: tile.24
$region0: #{tile.24}
  %s0 = inlined_call_operand.vmem [shape: f32[4,4], index: 0, kind: input, shape index: {}]
  %s1 = inlined_call_operand.vmem [shape: f32[16], index: 1, kind: output, shape index: {}]
  $region1: #{tile.24} parent=0
    #allocation0 [shape = 'u8[4096]{0}', space=vmem, size = 0x1000, scoped, tag = 'scoped mem for output reshape']
    #allocation1 [shape = 'u8[4096]{0}', space=vmem, size = 0x1000, scoped, tag = 'scoped mem for input reshape']
    %s3 = sshllo.u32 0, 4
    %v4 = vld [vmem:[%s0] sm:%s3]
    %5 = vst [vmem:[#allocation1] sm:%s3] %v4
    %v6 = vld [vmem:[#allocation1] sm:$0x1]
    %vm7 = vcmask 31744
    %8 = vst.msk [vmem:[#allocation0] sm:$0x1] %vm7, %v6
    %s9 = scalar_lea.vmem [#allocation1], 3
    %v10 = vld [vmem:[%s9] sm:$0x1]
    %11 = vrot.lane.b32.xlu0 %v10, 12
    %v12 = vpop.permute.xlu0 %11
    %vm13 = vcmask 130144
    %14 = vst.msk [vmem:[#allocation0] sm:$0x1] %vm13, %v12
    %s15 = scalar_lea.vmem [#allocation1], 2
    %v16 = vld [vmem:[%s15] sm:$0x1]
    %17 = vrot.lane.b32.xlu0 %v16, 8
    %v18 = vpop.permute.xlu0 %17
    %vm19 = vcmask 97344
    %20 = vst.msk [vmem:[#allocation0] sm:$0x1] %vm19, %v18
    %s21 = scalar_lea.vmem [#allocation1], 1
    %v22 = vld [vmem:[%s21] sm:$0x1]
    %23 = vrot.lane.b32.xlu0 %v22, 4
    %v24 = vpop.permute.xlu0 %23
    %vm25 = vcmask 64544
    %26 = vst.msk [vmem:[#allocation0] sm:$0x1] %vm25, %v24
    %s28 = sshllo.u32 0, 1
    %v30 = vld [vmem:[#allocation0] sm:%s28]
    %s31 = sshllo.u32 0, 1
    %32 = vst [vmem:[%s1] sm:%s31] %v30

// kernel: db_head_forward.3
$region0: #{db_head_forward.3}
  #allocation0 [shape = 'u32[]', space=smem, size = 0x4, offset = 0x4, fixed_abs, tag = 'smem constant byte address 0x4 - core index']
  #allocation1 [shape = 'u32[144,128]{1,0:T(1,128)}', space=vmem, size = 0x12000, scoped, tag = 'internal scratch']
  %s0 = inlined_call_operand.vmem [shape: f32[512,144], index: 0, kind: input, shape index: {}]
  %s1 = inlined_call_operand.vmem [shape: f32[144,8], index: 1, kind: input, shape index: {}]
  %s2 = inlined_call_operand.vmem [shape: f32[1,8], index: 2, kind: input, shape index: {}]
  %s3 = inlined_call_operand.vmem [shape: f32[512,8], index: 3, kind: output, shape index: {0}]
  %s4 = inlined_call_operand.vmem [shape: f32[2,1,8], index: 4, kind: output, shape index: {1}]
  %s5 = inlined_call_operand.vmem [shape: f32[2,1,8], index: 5, kind: output, shape index: {2}]
  %6 = xla_tuple %s3, %s4, %s5
  %s7 = sld [smem:[#allocation0]]
  $region65: #{db_head_forward.3} parent=0
    _
  %s9 = ssub.s32 1, %s7
  %s10 = scalar_select 0, %s9, %s7
  loop: start=0, step=1, limit=6
  $region2: #{db_head_forward.3} parent=0 // loop_pre_header
    _
  $region3: #{db_head_forward.3} parent=0 // loop_header
    %s12 = sphi 0, %s16
    %p13 = scmp.ge.s32.totalorder %s12, 6
    %s19 = sphi 0, %s31
    %s20 = sphi 0, %s27
    %s21 = sphi 0, %s19
    %s22 = sphi 0, %s20
    %s23 = sphi 0, %s21
    %s24 = sphi 0, %s22
    %s38 = sphi 0, %s40
    %s41 = sphi 0, %s38
    %s42 = sphi 0, %s41
    %s58 = sphi 0, %s42
    %s62 = sphi 0, %s62
    %s64 = sphi 0, %s62
    %s65 = sphi 0, %s64
    %s79 = sphi 0, %s65
    %s83 = sphi 0, %s83
    %s85 = sphi 0, %s83
    %s86 = sphi 0, %s85
    %s100 = sphi 0, %s86
    %s110 = sphi 0, %s112
    %s113 = sphi 0, %s110
    %s114 = sphi 0, %s113
    %s130 = sphi 0, %s114
    %s136 = sphi 0, %s138
    %s139 = sphi 0, %s136
    %s140 = sphi 0, %s139
    %s156 = sphi 0, %s140
    %s162 = sphi 0, %s164
    %s165 = sphi 0, %s162
    %s166 = sphi 0, %s165
    %s182 = sphi 0, %s166
  $region4: #{db_head_forward.3} parent=0 // loop_header_branch
    %15 = sbr.rel (%p13) target = $region8
  $region5: #{db_head_forward.3} parent=0 // loop_body
    %s17 = ssub.s32 %s12, 1
    %s18 = ssub.s32 %s12, 2
    %s25 = sadd.s32 1, %s20
    %p26 = scmp.ge.s32.totalorder %s25, 2
    %s27 = scalar_select %p26, 0, %s25
    %s28 = sadd.s32 1, %s19
    %s29 = scalar_select %p26, %s28, %s19
    %p30 = scmp.ge.s32.totalorder %s29, 2
    %s31 = scalar_select %p30, 0, %s29
    %s32 = smul.u32 %s19, 2
    %s33 = sadd.s32 %s32, %s20
    %s34 = smul.u32 %s31, 2
    %s35 = sadd.s32 %s34, %s27
    %s36 = ssub.s32 %s33, %s35
    %p37 = scmp.eq.s32.totalorder %s36, 0
    %s39 = sadd.s32 %s38, 1
    %s40 = scalar_select %p37, %s38, %s39
    %p43 = pneg %p37
    %p44 = scmp.eq.s32.totalorder %s12, 3
    %p45 = por %p43, %p44
    %p46 = scmp.ne.s32.totalorder %s38, %s41
    %p47 = scmp.eq.s32.totalorder %s12, 0
    %p48 = por %p46, %p47
    %p49 = scmp.ne.s32.totalorder %s38, %s41
    %p50 = scmp.eq.s32.totalorder %s17, 3
    %p51 = por %p49, %p50
    %p52 = scmp.ne.s32.totalorder %s41, %s42
    %p53 = scmp.eq.s32.totalorder %s17, 0
    %p54 = por %p52, %p53
    %p55 = scmp.ne.s32.totalorder %s41, %s42
    %p56 = scmp.eq.s32.totalorder %s18, 3
    %p57 = por %p55, %p56
    %p59 = scmp.ne.s32.totalorder %s42, %s58
    %p60 = scmp.eq.s32.totalorder %s18, 0
    %p61 = por %p59, %p60
    %s63 = sadd.s32 %s62, 1
    %p66 = scmp.eq.s32.totalorder %s12, 3
    %p67 = scmp.ne.s32.totalorder %s62, %s64
    %p68 = scmp.eq.s32.totalorder %s12, 0
    %p69 = por %p67, %p68
    %p70 = scmp.ne.s32.totalorder %s62, %s64
    %p71 = scmp.eq.s32.totalorder %s17, 3
    %p72 = por %p70, %p71
    %p73 = scmp.ne.s32.totalorder %s64, %s65
    %p74 = scmp.eq.s32.totalorder %s17, 0
    %p75 = por %p73, %p74
    %p76 = scmp.ne.s32.totalorder %s64, %s65
    %p77 = scmp.eq.s32.totalorder %s18, 3
    %p78 = por %p76, %p77
    %p80 = scmp.ne.s32.totalorder %s65, %s79
    %p81 = scmp.eq.s32.totalorder %s18, 0
    %p82 = por %p80, %p81
    %s84 = sadd.s32 %s83, 1
    %p87 = scmp.eq.s32.totalorder %s12, 3
    %p88 = scmp.ne.s32.totalorder %s83, %s85
    %p89 = scmp.eq.s32.totalorder %s12, 0
    %p90 = por %p88, %p89
    %p91 = scmp.ne.s32.totalorder %s83, %s85
    %p92 = scmp.eq.s32.totalorder %s17, 3
    %p93 = por %p91, %p92
    %p94 = scmp.ne.s32.totalorder %s85, %s86
    %p95 = scmp.eq.s32.totalorder %s17, 0
    %p96 = por %p94, %p95
    %p97 = scmp.ne.s32.totalorder %s85, %s86
    %p98 = scmp.eq.s32.totalorder %s18, 3
    %p99 = por %p97, %p98
    %p101 = scmp.ne.s32.totalorder %s86, %s100
    %p102 = scmp.eq.s32.totalorder %s18, 0
    %p103 = por %p101, %p102
    %s104 = smul.u32 %s19, 2
    %s105 = sadd.s32 %s104, %s20
    %s106 = smul.u32 %s31, 2
    %s107 = sadd.s32 %s106, %s27
    %s108 = ssub.s32 %s105, %s107
    %p109 = scmp.eq.s32.totalorder %s108, 0
    %s111 = sadd.s32 %s110, 1
    %s112 = scalar_select %p109, %s110, %s111
    %p115 = pneg %p109
    %p116 = scmp.eq.s32.totalorder %s12, 3
    %p117 = por %p115, %p116
    %p118 = scmp.ne.s32.totalorder %s110, %s113
    %p119 = scmp.eq.s32.totalorder %s12, 0
    %p120 = por %p118, %p119
    %p121 = scmp.ne.s32.totalorder %s110, %s113
    %p122 = scmp.eq.s32.totalorder %s17, 3
    %p123 = por %p121, %p122
    %p124 = scmp.ne.s32.totalorder %s113, %s114
    %p125 = scmp.eq.s32.totalorder %s17, 0
    %p126 = por %p124, %p125
    %p127 = scmp.ne.s32.totalorder %s113, %s114
    %p128 = scmp.eq.s32.totalorder %s18, 3
    %p129 = por %p127, %p128
    %p131 = scmp.ne.s32.totalorder %s114, %s130
    %p132 = scmp.eq.s32.totalorder %s18, 0
    %p133 = por %p131, %p132
    %s134 = ssub.s32 %s19, %s31
    %p135 = scmp.eq.s32.totalorder %s134, 0
    %s137 = sadd.s32 %s136, 1
    %s138 = scalar_select %p135, %s136, %s137
    %p141 = pneg %p135
    %p142 = scmp.eq.s32.totalorder %s12, 3
    %p143 = por %p141, %p142
    %p144 = scmp.ne.s32.totalorder %s136, %s139
    %p145 = scmp.eq.s32.totalorder %s12, 0
    %p146 = por %p144, %p145
    %p147 = scmp.ne.s32.totalorder %s136, %s139
    %p148 = scmp.eq.s32.totalorder %s17, 3
    %p149 = por %p147, %p148
    %p150 = scmp.ne.s32.totalorder %s139, %s140
    %p151 = scmp.eq.s32.totalorder %s17, 0
    %p152 = por %p150, %p151
    %p153 = scmp.ne.s32.totalorder %s139, %s140
    %p154 = scmp.eq.s32.totalorder %s18, 3
    %p155 = por %p153, %p154
    %p157 = scmp.ne.s32.totalorder %s140, %s156
    %p158 = scmp.eq.s32.totalorder %s18, 0
    %p159 = por %p157, %p158
    %s160 = ssub.s32 %s19, %s31
    %p161 = scmp.eq.s32.totalorder %s160, 0
    %s163 = sadd.s32 %s162, 1
    %s164 = scalar_select %p161, %s162, %s163
    %p167 = pneg %p161
    %p168 = scmp.eq.s32.totalorder %s12, 3
    %p169 = por %p167, %p168
    %p170 = scmp.ne.s32.totalorder %s162, %s165
    %p171 = scmp.eq.s32.totalorder %s12, 0
    %p172 = por %p170, %p171
    %p173 = scmp.ne.s32.totalorder %s162, %s165
    %p174 = scmp.eq.s32.totalorder %s17, 3
    %p175 = por %p173, %p174
    %p176 = scmp.ne.s32.totalorder %s165, %s166
    %p177 = scmp.eq.s32.totalorder %s17, 0
    %p178 = por %p176, %p177
    %p179 = scmp.ne.s32.totalorder %s165, %s166
    %p180 = scmp.eq.s32.totalorder %s18, 3
    %p181 = por %p179, %p180
    %p183 = scmp.ne.s32.totalorder %s166, %s182
    %p184 = scmp.eq.s32.totalorder %s18, 0
    %p185 = por %p183, %p184
    %p186 = scmp.le.s32.totalorder 1, %s12
    %p187 = scmp.lt.s32.totalorder %s12, 5
    %p188 = pnand %p186, %p187
    %p189 = pneg %p188
    // Predicated region
    $region9: #{db_head_forward.3} parent=5 // pred_check
      _
    $region10: #{db_head_forward.3} parent=5 // pred_check_branch
      %191 = sbr.rel (%p188) target = $region12
    $region11: #{db_head_forward.3} parent=5 // pred_region
      %s192 = ssub.s32 %s12, 1
      // Predicated region
      $region13: #{db_head_forward.3} parent=11 // pred_check
        %p193 = pneg %p75
      $region14: #{db_head_forward.3} parent=11 // pred_check_branch
        %195 = sbr.rel (%p193) target = $region16
      $region15: #{db_head_forward.3} parent=11 // pred_region
        _
      $region16: #{db_head_forward.3} parent=11 // pred_fallthru
        _
      // Predicated region
      $region17: #{db_head_forward.3} parent=11 // pred_check
        %p196 = pneg %p96
      $region18: #{db_head_forward.3} parent=11 // pred_check_branch
        %198 = sbr.rel (%p196) target = $region20
      $region19: #{db_head_forward.3} parent=11 // pred_region
        _
      $region20: #{db_head_forward.3} parent=11 // pred_fallthru
        _
    $region12: #{db_head_forward.3} parent=5 // pred_fallthru
      _
    %p199 = scmp.lt.s32.totalorder %s12, 4
    // Predicated region
    $region21: #{db_head_forward.3} parent=5 // pred_check
      %p200 = pneg %p199
    $region22: #{db_head_forward.3} parent=5 // pred_check_branch
      %202 = sbr.rel (%p200) target = $region24
    $region23: #{db_head_forward.3} parent=5 // pred_region
      // Predicated region
      $region25: #{db_head_forward.3} parent=23 // pred_check
        %p203 = pneg %p48
      $region26: #{db_head_forward.3} parent=23 // pred_check_branch
        %205 = sbr.rel (%p203) target = $region28
      $region27: #{db_head_forward.3} parent=23 // pred_region
        %s206 = smul.u32 %s19, 2
        %s207 = sadd.s32 %s206, %s20
        %s208 = smul.u32 16, %s207
        %p209 = scmp.lt.s32.totalorder %s208, 63
        %s210 = scalar_select %p209, %s208, 63
        %s211 = smul.addr %s210, 2
        %s212 = smul.addr %s211, 8
        %s213 = scalar_lea.vmem %s0, %s212
        %s214 = smul.u32 %s19, 2
        %s215 = sadd.s32 %s214, %s20
        %s216 = smul.u32 16, %s215
      $region28: #{db_head_forward.3} parent=23 // pred_fallthru
        _
    $region24: #{db_head_forward.3} parent=5 // pred_fallthru
      _
    %p217 = scmp.le.s32.totalorder 1, %s12
    %p218 = scmp.lt.s32.totalorder %s12, 5
    %p219 = pnand %p217, %p218
    %p220 = pneg %p219
    // Predicated region
    $region29: #{db_head_forward.3} parent=5 // pred_check
      _
    $region30: #{db_head_forward.3} parent=5 // pred_check_branch
      %222 = sbr.rel (%p219) target = $region32
    $region31: #{db_head_forward.3} parent=5 // pred_region
      %s223 = ssub.s32 %s12, 1
      %s224 = smul.u32 %s21, 2
      %s225 = sadd.s32 %s224, %s22
      %s226 = smul.u32 16, %s225
      %p227 = scmp.lt.s32.totalorder %s226, 63
      %s228 = scalar_select %p227, %s226, 63
      %s229 = smul.addr %s228, 2
      %s230 = smul.addr %s229, 8
      %s231 = scalar_lea.vmem %s0, %s230
      %p232 = pneg %p54
      %p233 = pneg %p51
      %p234 = pneg %p75
      %p235 = pneg %p72
      %p236 = pneg %p96
      %p237 = pneg %p93
      %p238 = pneg %p126
      %p239 = pneg %p123
      %s240 = smul.u32 %s21, 2
      %s241 = sadd.s32 %s240, %s22
      %s242 = smul.u32 16, %s241
      %p243 = scmp.lt.s32.totalorder %s242, 63
      %s244 = scalar_select %p243, %s242, 63
      %s245 = smul.addr %s244, 8
      %s246 = scalar_lea.vmem %s3, %s245
      %p247 = pneg %p152
      %p248 = pneg %p149
      %p249 = scmp.lt.s32.totalorder %s21, 1
      %s250 = scalar_select %p249, %s21, 1
      %s251 = scalar_lea.vmem %s4, %s250
      %p252 = pneg %p178
      %p253 = pneg %p175
      %p254 = scmp.lt.s32.totalorder %s21, 1
      %s255 = scalar_select %p254, %s21, 1
      %s256 = scalar_lea.vmem %s5, %s255
      %s257 = smul.u32 %s21, 2
      %s258 = sadd.s32 %s257, %s22
      %s259 = smul.u32 16, %s258
      %p260 = scmp.lt.s32.totalorder %s259, 63
      %s261 = scalar_select %p260, %s259, 63
      %s262 = smul.addr %s261, 2
      %s263 = smul.addr %s262, 8
      %s264 = scalar_lea.vmem %s0, %s263
      %s265 = smul.u32 %s21, 2
      %s266 = sadd.s32 %s265, %s22
      %s267 = smul.u32 16, %s266
      %s268 = smul.u32 %s21, 2
      %s269 = sadd.s32 %s268, %s22
      %s270 = smul.u32 16, %s269
      %p271 = scmp.lt.s32.totalorder %s270, 63
      %s272 = scalar_select %p271, %s270, 63
      %s273 = smul.addr %s272, 8
      %s274 = scalar_lea.vmem %s3, %s273
      %s275 = smul.u32 %s21, 2
      %s276 = sadd.s32 %s275, %s22
      %s277 = smul.u32 16, %s276
      %p278 = scmp.lt.s32.totalorder %s21, 1
      %s279 = scalar_select %p278, %s21, 1
      %s280 = scalar_lea.vmem %s4, %s279
      %p281 = scmp.lt.s32.totalorder %s21, 1
      %s282 = scalar_select %p281, %s21, 1
      %s283 = scalar_lea.vmem %s5, %s282
      %p284 = scmp.eq.s32.totalorder %s22, 0
      // Predicated region
      $region33: #{db_head_forward.3} parent=31 // pred_check
        %p285 = pneg %p284
      $region34: #{db_head_forward.3} parent=31 // pred_check_branch
        %287 = sbr.rel (%p285) target = $region36
      $region35: #{db_head_forward.3} parent=31 // pred_region
        %vm288 = vcmask 57344
        %289 = vst.msk [vmem:[%s280] sm:$0x1] %vm288, 0.0
        %290 = vst.msk [vmem:[%s283] sm:$0x1] %vm288, 0.0
      $region36: #{db_head_forward.3} parent=31 // pred_fallthru
        _
      %v291 = vld [vmem:[%s264] sm:$0xff]
      %v292 = vld [vmem:[%s264 + $0x8] sm:$0xff]
      %v293 = vld [vmem:[%s264 + $0x10] sm:$0xff]
      %v294 = vld [vmem:[%s264 + $0x18] sm:$0xff]
      %v295 = vld [vmem:[%s264 + $0x20] sm:$0xff]
      %v296 = vld [vmem:[%s264 + $0x28] sm:$0xff]
      %v297 = vld [vmem:[%s264 + $0x30] sm:$0xff]
      %v298 = vld [vmem:[%s264 + $0x38] sm:$0xff]
      %v299 = vld [vmem:[%s264 + $0x40] sm:$0xff]
      %v300 = vld [vmem:[%s264 + $0x48] sm:$0xff]
      %v301 = vld [vmem:[%s264 + $0x50] sm:$0xff]
      %v302 = vld [vmem:[%s264 + $0x58] sm:$0xff]
      %v303 = vld [vmem:[%s264 + $0x60] sm:$0xff]
      %v304 = vld [vmem:[%s264 + $0x68] sm:$0xff]
      %v305 = vld [vmem:[%s264 + $0x70] sm:$0xff]
      %v306 = vld [vmem:[%s264 + $0x78] sm:$0xff]
      %v307 = vld [vmem:[%s264 + $0x80] sm:$0xff]
      %v308 = vld [vmem:[%s264 + $0x88] sm:$0xff]
      %v309 = vld [vmem:[%s264 + $0x90] sm:$0xff]
      %v310 = vld [vmem:[%s264 + $0x98] sm:$0xff]
      %v311 = vld [vmem:[%s264 + $0xa0] sm:$0xff]
      %v312 = vld [vmem:[%s264 + $0xa8] sm:$0xff]
      %v313 = vld [vmem:[%s264 + $0xb0] sm:$0xff]
      %v314 = vld [vmem:[%s264 + $0xb8] sm:$0xff]
      %v315 = vld [vmem:[%s264 + $0xc0] sm:$0xff]
      %v316 = vld [vmem:[%s264 + $0xc8] sm:$0xff]
      %v317 = vld [vmem:[%s264 + $0xd0] sm:$0xff]
      %v318 = vld [vmem:[%s264 + $0xd8] sm:$0xff]
      %v319 = vld [vmem:[%s264 + $0xe0] sm:$0xff]
      %v320 = vld [vmem:[%s264 + $0xe8] sm:$0xff]
      %v321 = vld [vmem:[%s264 + $0xf0] sm:$0xff]
      %v322 = vld [vmem:[%s264 + $0xf8] sm:$0xff]
      %v323 = vld [vmem:[%s1] sm:$0xff]
      %v324 = vld [vmem:[%s1 + $0x8] sm:$0xff]
      %v325 = vld [vmem:[%s1 + $0x10] sm:$0xff]
      %v326 = vld [vmem:[%s1 + $0x18] sm:$0xff]
      %v327 = vld [vmem:[%s1 + $0x20] sm:$0xff]
      %v328 = vld [vmem:[%s1 + $0x28] sm:$0xff]
      %v329 = vld [vmem:[%s1 + $0x30] sm:$0xff]
      %v330 = vld [vmem:[%s1 + $0x38] sm:$0xff]
      %v331 = vld [vmem:[%s1 + $0x40] sm:$0xff]
      %v332 = vld [vmem:[%s1 + $0x48] sm:$0xff]
      %v333 = vld [vmem:[%s1 + $0x50] sm:$0xff]
      %v334 = vld [vmem:[%s1 + $0x58] sm:$0xff]
      %v335 = vld [vmem:[%s1 + $0x60] sm:$0xff]
      %v336 = vld [vmem:[%s1 + $0x68] sm:$0xff]
      %v337 = vld [vmem:[%s1 + $0x70] sm:$0xff]
      %v338 = vld [vmem:[%s1 + $0x78] sm:$0xff]
      %v339 = vld [vmem:[%s1 + $0x80] sm:$0xff]
      %v340 = vld [vmem:[%s1 + $0x88] sm:$0xff]
      %v341 = vld [vmem:[%s2] sm:$0x1]
      %v343 = vlaneseq
      %v344 = vshrl.u32 %v343, 7
      %v345 = vsub.s32 0, %v344
      %v346 = vrot.slane %v341, %v345
      %vm348 = vcmask 130048
      %v350 = vsel %vm348, %v292, 0
      %v353 = vsel %vm348, %v294, 0
      %v356 = vsel %vm348, %v296, 0
      %v359 = vsel %vm348, %v298, 0
      %v362 = vsel %vm348, %v300, 0
      %v365 = vsel %vm348, %v302, 0
      %v368 = vsel %vm348, %v304, 0
      %v371 = vsel %vm348, %v306, 0
      %v374 = vsel %vm348, %v308, 0
      %v377 = vsel %vm348, %v310, 0
      %v380 = vsel %vm348, %v312, 0
      %v383 = vsel %vm348, %v314, 0
      %v386 = vsel %vm348, %v316, 0
      %v389 = vsel %vm348, %v318, 0
      %v392 = vsel %vm348, %v320, 0
      %v395 = vsel %vm348, %v322, 0
      %397 = vmatprep.subr.mxu0 0.0
      %398 = vmatpush1.msra.mxu0 %v323
      %399 = vmatprep.subr.mxu0 0.0
      %400 = vmatpush1.msra.mxu0 %v324
      %401 = vmatprep.subr.mxu0 0.0
      %402 = vmatpush1.msra.mxu0 %v325
      %403 = vmatprep.subr.mxu0 0.0
      %404 = vmatpush1.msra.mxu0 %v326
      %405 = vmatprep.subr.mxu0 0.0
      %406 = vmatpush1.msra.mxu0 %v327
      %407 = vmatprep.subr.mxu0 0.0
      %408 = vmatpush1.msra.mxu0 %v328
      %409 = vmatprep.subr.mxu0 0.0
      %410 = vmatpush1.msra.mxu0 %v329
      %411 = vmatprep.subr.mxu0 0.0
      %412 = vmatpush1.msra.mxu0 %v330
      %413 = vmatprep.subr.mxu0 0.0
      %414 = vmatpush1.msra.mxu0 %v331
      %415 = vmatprep.subr.mxu0 0.0
      %416 = vmatpush1.msra.mxu0 %v332
      %417 = vmatprep.subr.mxu0 0.0
      %418 = vmatpush1.msra.mxu0 %v333
      %419 = vmatprep.subr.mxu0 0.0
      %420 = vmatpush1.msra.mxu0 %v334
      %421 = vmatprep.subr.mxu0 0.0
      %422 = vmatpush1.msra.mxu0 %v335
      %423 = vmatprep.subr.mxu0 0.0
      %424 = vmatpush1.msra.mxu0 %v336
      %425 = vmatprep.subr.mxu0 0.0
      %426 = vmatpush1.msra.mxu0 %v337
      %427 = vmatprep.subr.mxu0 0.0
      %428 = vmatpush1.msra.mxu0 %v338
      %429 = vmatprep.subr.mxu0 0.0
      %430 = vmatpush1.msra.mxu0 %v339
      %431 = vmatprep.subr.mxu0 0.0
      %432 = vmatpush1.msra.mxu0 %v340
      %433 = vmatprep.subr.mxu0 0.0
      %434 = vmatpush1.msra.mxu0 0.0
      %435 = vmatprep.subr.mxu0 0.0
      %436 = vmatpush1.msra.mxu0 0.0
      %437 = vmatprep.subr.mxu0 0.0
      %438 = vmatpush1.msra.mxu0 0.0
      %439 = vmatprep.subr.mxu0 0.0
      %440 = vmatpush1.msra.mxu0 0.0
      %441 = vmatprep.subr.mxu0 0.0
      %442 = vmatpush1.msra.mxu0 0.0
      %443 = vmatprep.subr.mxu0 0.0
      %444 = vmatpush1.msra.mxu0 0.0
      %445 = vmatprep.subr.mxu0 0.0
      %446 = vmatpush1.msra.mxu0 0.0
      %447 = vmatprep.subr.mxu0 0.0
      %448 = vmatpush1.msra.mxu0 0.0
      %449 = vmatprep.subr.mxu0 0.0
      %450 = vmatpush1.msra.mxu0 0.0
      %451 = vmatprep.subr.mxu0 0.0
      %452 = vmatpush1.msra.mxu0 0.0
      %453 = vmatprep.subr.mxu0 0.0
      %454 = vmatpush1.msra.mxu0 0.0
      %455 = vmatprep.subr.mxu0 0.0
      %456 = vmatpush1.msra.mxu0 0.0
      %457 = vmatprep.subr.mxu0 0.0
      %458 = vmatpush1.msra.mxu0 0.0
      %459 = vmatprep.subr.mxu0 0.0
      %460 = vmatpush1.msra.mxu0 0.0
      %461 = vmatprep.mubr.f32.mxu0 %v350
      %462 = vmatmul.mubr.f32.gmra.mrb[0].mxu0 %v291
      %v463 = vpop.f32.mrb[0].mxu0
      %v464 = vadd.f32 %v346, %v463
      %v465 = vpop.f32.mrb[0].mxu0
      %466 = vmatprep.mubr.f32.mxu0 %v353
      %467 = vmatmul.mubr.f32.gmra.mrb[0].mxu0 %v293
      %v468 = vpop.f32.mrb[0].mxu0
      %v469 = vadd.f32 %v346, %v468
      %v470 = vpop.f32.mrb[0].mxu0
      %471 = vmatprep.mubr.f32.mxu0 %v356
      %472 = vmatmul.mubr.f32.gmra.mrb[0].mxu0 %v295
      %v473 = vpop.f32.mrb[0].mxu0
      %v474 = vadd.f32 %v346, %v473
      %v475 = vpop.f32.mrb[0].mxu0
      %476 = vmatprep.mubr.f32.mxu0 %v359
      %477 = vmatmul.mubr.f32.gmra.mrb[0].mxu0 %v297
      %v478 = vpop.f32.mrb[0].mxu0
      %v479 = vadd.f32 %v346, %v478
      %v480 = vpop.f32.mrb[0].mxu0
      %481 = vmatprep.mubr.f32.mxu0 %v362
      %482 = vmatmul.mubr.f32.gmra.mrb[0].mxu0 %v299
      %v483 = vpop.f32.mrb[0].mxu0
      %v484 = vadd.f32 %v346, %v483
      %v485 = vpop.f32.mrb[0].mxu0
      %486 = vmatprep.mubr.f32.mxu0 %v365
      %487 = vmatmul.mubr.f32.gmra.mrb[0].mxu0 %v301
      %v488 = vpop.f32.mrb[0].mxu0
      %v489 = vadd.f32 %v346, %v488
      %v490 = vpop.f32.mrb[0].mxu0
      %491 = vmatprep.mubr.f32.mxu0 %v368
      %492 = vmatmul.mubr.f32.gmra.mrb[0].mxu0 %v303
      %v493 = vpop.f32.mrb[0].mxu0
      %v494 = vadd.f32 %v346, %v493
      %v495 = vpop.f32.mrb[0].mxu0
      %496 = vmatprep.mubr.f32.mxu0 %v371
      %497 = vmatmul.mubr.f32.gmra.mrb[0].mxu0 %v305
      %v498 = vpop.f32.mrb[0].mxu0
      %v499 = vadd.f32 %v346, %v498
      %v500 = vpop.f32.mrb[0].mxu0
      %501 = vmatprep.mubr.f32.mxu0 %v374
      %502 = vmatmul.mubr.f32.gmra.mrb[0].mxu0 %v307
      %v503 = vpop.f32.mrb[0].mxu0
      %v504 = vadd.f32 %v346, %v503
      %v505 = vpop.f32.mrb[0].mxu0
      %506 = vmatprep.mubr.f32.mxu0 %v377
      %507 = vmatmul.mubr.f32.gmra.mrb[0].mxu0 %v309
      %v508 = vpop.f32.mrb[0].mxu0
      %v509 = vadd.f32 %v346, %v508
      %v510 = vpop.f32.mrb[0].mxu0
      %511 = vmatprep.mubr.f32.mxu0 %v380
      %512 = vmatmul.mubr.f32.gmra.mrb[0].mxu0 %v311
      %v513 = vpop.f32.mrb[0].mxu0
      %v514 = vadd.f32 %v346, %v513
      %v515 = vpop.f32.mrb[0].mxu0
      %516 = vmatprep.mubr.f32.mxu0 %v383
      %517 = vmatmul.mubr.f32.gmra.mrb[0].mxu0 %v313
      %v518 = vpop.f32.mrb[0].mxu0
      %v519 = vadd.f32 %v346, %v518
      %v520 = vpop.f32.mrb[0].mxu0
      %521 = vmatprep.mubr.f32.mxu0 %v386
      %522 = vmatmul.mubr.f32.gmra.mrb[0].mxu0 %v315
      %v523 = vpop.f32.mrb[0].mxu0
      %v524 = vadd.f32 %v346, %v523
      %v525 = vpop.f32.mrb[0].mxu0
      %526 = vmatprep.mubr.f32.mxu0 %v389
      %527 = vmatmul.mubr.f32.gmra.mrb[0].mxu0 %v317
      %v528 = vpop.f32.mrb[0].mxu0
      %v529 = vadd.f32 %v346, %v528
      %v530 = vpop.f32.mrb[0].mxu0
      %531 = vmatprep.mubr.f32.mxu0 %v392
      %532 = vmatmul.mubr.f32.gmra.mrb[0].mxu0 %v319
      %v533 = vpop.f32.mrb[0].mxu0
      %v534 = vadd.f32 %v346, %v533
      %v535 = vpop.f32.mrb[0].mxu0
      %536 = vmatprep.mubr.f32.mxu0 %v395
      %537 = vmatmul.mubr.f32.gmra.mrb[0].mxu0 %v321
      %v538 = vpop.f32.mrb[0].mxu0
      %v539 = vadd.f32 %v346, %v538
      %v540 = vpop.f32.mrb[0].mxu0
      %541 = vdwg.mxu0
      %vm542 = vcmask 64512
      %543 = vst.msk [vmem:[%s274] sm:$0xff] %vm542, %v464
      %544 = vst.msk [vmem:[%s274 + $0x8] sm:$0xff] %vm542, %v469
      %545 = vst.msk [vmem:[%s274 + $0x10] sm:$0xff] %vm542, %v474
      %546 = vst.msk [vmem:[%s274 + $0x18] sm:$0xff] %vm542, %v479
      %547 = vst.msk [vmem:[%s274 + $0x20] sm:$0xff] %vm542, %v484
      %548 = vst.msk [vmem:[%s274 + $0x28] sm:$0xff] %vm542, %v489
      %549 = vst.msk [vmem:[%s274 + $0x30] sm:$0xff] %vm542, %v494
      %550 = vst.msk [vmem:[%s274 + $0x38] sm:$0xff] %vm542, %v499
      %551 = vst.msk [vmem:[%s274 + $0x40] sm:$0xff] %vm542, %v504
      %552 = vst.msk [vmem:[%s274 + $0x48] sm:$0xff] %vm542, %v509
      %553 = vst.msk [vmem:[%s274 + $0x50] sm:$0xff] %vm542, %v514
      %554 = vst.msk [vmem:[%s274 + $0x58] sm:$0xff] %vm542, %v519
      %555 = vst.msk [vmem:[%s274 + $0x60] sm:$0xff] %vm542, %v524
      %556 = vst.msk [vmem:[%s274 + $0x68] sm:$0xff] %vm542, %v529
      %557 = vst.msk [vmem:[%s274 + $0x70] sm:$0xff] %vm542, %v534
      %558 = vst.msk [vmem:[%s274 + $0x78] sm:$0xff] %vm542, %v539
      %v559 = vld [vmem:[%s280] sm:$0x1]
      %v560 = vsel %vm542, %v464, 0.0
      %v561 = vsel %vm542, %v469, 0.0
      %v562 = vadd.f32 %v560, %v561
      %v563 = vsel %vm542, %v474, 0.0
      %v564 = vadd.f32 %v562, %v563
      %v565 = vsel %vm542, %v479, 0.0
      %v566 = vadd.f32 %v564, %v565
      %v567 = vsel %vm542, %v484, 0.0
      %v568 = vadd.f32 %v566, %v567
      %v569 = vsel %vm542, %v489, 0.0
      %v570 = vadd.f32 %v568, %v569
      %v571 = vsel %vm542, %v494, 0.0
      %v572 = vadd.f32 %v570, %v571
      %v573 = vsel %vm542, %v499, 0.0
      %v574 = vadd.f32 %v572, %v573
      %v575 = vsel %vm542, %v504, 0.0
      %v576 = vadd.f32 %v574, %v575
      %v577 = vsel %vm542, %v509, 0.0
      %v578 = vadd.f32 %v576, %v577
      %v579 = vsel %vm542, %v514, 0.0
      %v580 = vadd.f32 %v578, %v579
      %v581 = vsel %vm542, %v519, 0.0
      %v582 = vadd.f32 %v580, %v581
      %v583 = vsel %vm542, %v524, 0.0
      %v584 = vadd.f32 %v582, %v583
      %v585 = vsel %vm542, %v529, 0.0
      %v586 = vadd.f32 %v584, %v585
      %v587 = vsel %vm542, %v534, 0.0
      %v588 = vadd.f32 %v586, %v587
      %v589 = vsel %vm542, %v539, 0.0
      %v590 = vadd.f32 %v588, %v589
      %v591 = vrot.slane %v590, 4
      %v592 = vadd.f32 %v590, %v591
      %v593 = vrot.slane %v592, 2
      %v594 = vadd.f32 %v592, %v593
      %v595 = vrot.slane %v594, 1
      %v596 = vadd.f32 %v594, %v595
      %v597 = vadd.f32 %v559, %v596
      %vm598 = vcmask 57344
      %599 = vst.msk [vmem:[%s280] sm:$0x1] %vm598, %v597
      %v600 = vld [vmem:[%s283] sm:$0x1]
      %v601 = vmul.f32 %v464, %v464
      %v602 = vmul.f32 %v469, %v469
      %v603 = vmul.f32 %v474, %v474
      %v604 = vmul.f32 %v479, %v479
      %v605 = vmul.f32 %v484, %v484
      %v606 = vmul.f32 %v489, %v489
      %v607 = vmul.f32 %v494, %v494
      %v608 = vmul.f32 %v499, %v499
      %v609 = vmul.f32 %v504, %v504
      %v610 = vmul.f32 %v509, %v509
      %v611 = vmul.f32 %v514, %v514
      %v612 = vmul.f32 %v519, %v519
      %v613 = vmul.f32 %v524, %v524
      %v614 = vmul.f32 %v529, %v529
      %v615 = vmul.f32 %v534, %v534
      %v616 = vmul.f32 %v539, %v539
      %v617 = vsel %vm542, %v601, 0.0
      %v618 = vsel %vm542, %v602, 0.0
      %v619 = vadd.f32 %v617, %v618
      %v620 = vsel %vm542, %v603, 0.0
      %v621 = vadd.f32 %v619, %v620
      %v622 = vsel %vm542, %v604, 0.0
      %v623 = vadd.f32 %v621, %v622
      %v624 = vsel %vm542, %v605, 0.0
      %v625 = vadd.f32 %v623, %v624
      %v626 = vsel %vm542, %v606, 0.0
      %v627 = vadd.f32 %v625, %v626
      %v628 = vsel %vm542, %v607, 0.0
      %v629 = vadd.f32 %v627, %v628
      %v630 = vsel %vm542, %v608, 0.0
      %v631 = vadd.f32 %v629, %v630
      %v632 = vsel %vm542, %v609, 0.0
      %v633 = vadd.f32 %v631, %v632
      %v634 = vsel %vm542, %v610, 0.0
      %v635 = vadd.f32 %v633, %v634
      %v636 = vsel %vm542, %v611, 0.0
      %v637 = vadd.f32 %v635, %v636
      %v638 = vsel %vm542, %v612, 0.0
      %v639 = vadd.f32 %v637, %v638
      %v640 = vsel %vm542, %v613, 0.0
      %v641 = vadd.f32 %v639, %v640
      %v642 = vsel %vm542, %v614, 0.0
      %v643 = vadd.f32 %v641, %v642
      %v644 = vsel %vm542, %v615, 0.0
      %v645 = vadd.f32 %v643, %v644
      %v646 = vsel %vm542, %v616, 0.0
      %v647 = vadd.f32 %v645, %v646
      %v648 = vrot.slane %v647, 4
      %v649 = vadd.f32 %v647, %v648
      %v650 = vrot.slane %v649, 2
      %v651 = vadd.f32 %v649, %v650
      %v652 = vrot.slane %v651, 1
      %v653 = vadd.f32 %v651, %v652
      %v654 = vadd.f32 %v600, %v653
      %655 = vst.msk [vmem:[%s283] sm:$0x1] %vm598, %v654
      %s656 = smul.u32 %s21, 2
      %s657 = sadd.s32 %s656, %s22
      %s658 = smul.u32 16, %s657
      %p659 = scmp.lt.s32.totalorder %s658, 63
      %s660 = scalar_select %p659, %s658, 63
      %s661 = smul.addr %s660, 8
      %s662 = scalar_lea.vmem %s3, %s661
      %p663 = scmp.lt.s32.totalorder %s21, 1
      %s664 = scalar_select %p663, %s21, 1
      %s665 = scalar_lea.vmem %s4, %s664
      %p666 = scmp.lt.s32.totalorder %s21, 1
      %s667 = scalar_select %p666, %s21, 1
      %s668 = scalar_lea.vmem %s5, %s667
      // Predicated region
      $region37: #{db_head_forward.3} parent=31 // pred_check
        %p669 = pneg %p123
      $region38: #{db_head_forward.3} parent=31 // pred_check_branch
        %671 = sbr.rel (%p669) target = $region40
      $region39: #{db_head_forward.3} parent=31 // pred_region
        %s672 = smul.u32 %s21, 2
        %s673 = sadd.s32 %s672, %s22
        %s674 = smul.u32 16, %s673
      $region40: #{db_head_forward.3} parent=31 // pred_fallthru
        _
      // Predicated region
      $region41: #{db_head_forward.3} parent=31 // pred_check
        %p675 = pneg %p149
      $region42: #{db_head_forward.3} parent=31 // pred_check_branch
        %677 = sbr.rel (%p675) target = $region44
      $region43: #{db_head_forward.3} parent=31 // pred_region
        _
      $region44: #{db_head_forward.3} parent=31 // pred_fallthru
        _
      // Predicated region
      $region45: #{db_head_forward.3} parent=31 // pred_check
        %p678 = pneg %p175
      $region46: #{db_head_forward.3} parent=31 // pred_check_branch
        %680 = sbr.rel (%p678) target = $region48
      $region47: #{db_head_forward.3} parent=31 // pred_region
        _
      $region48: #{db_head_forward.3} parent=31 // pred_fallthru
        _
    $region32: #{db_head_forward.3} parent=5 // pred_fallthru
      _
    %p681 = scmp.le.s32.totalorder 2, %s12
    // Predicated region
    $region49: #{db_head_forward.3} parent=5 // pred_check
      %p682 = pneg %p681
    $region50: #{db_head_forward.3} parent=5 // pred_check_branch
      %684 = sbr.rel (%p682) target = $region52
    $region51: #{db_head_forward.3} parent=5 // pred_region
      %s685 = ssub.s32 %s12, 2
      // Predicated region
      $region53: #{db_head_forward.3} parent=51 // pred_check
        %p686 = pneg %p129
      $region54: #{db_head_forward.3} parent=51 // pred_check_branch
        %688 = sbr.rel (%p686) target = $region56
      $region55: #{db_head_forward.3} parent=51 // pred_region
        %s689 = smul.u32 %s23, 2
        %s690 = sadd.s32 %s689, %s24
        %s691 = smul.u32 16, %s690
        %p692 = scmp.lt.s32.totalorder %s691, 63
        %s693 = scalar_select %p692, %s691, 63
        %s694 = smul.addr %s693, 8
        %s695 = scalar_lea.vmem %s3, %s694
      $region56: #{db_head_forward.3} parent=51 // pred_fallthru
        _
      // Predicated region
      $region57: #{db_head_forward.3} parent=51 // pred_check
        %p696 = pneg %p155
      $region58: #{db_head_forward.3} parent=51 // pred_check_branch
        %698 = sbr.rel (%p696) target = $region60
      $region59: #{db_head_forward.3} parent=51 // pred_region
        %p699 = scmp.lt.s32.totalorder %s23, 1
        %s700 = scalar_select %p699, %s23, 1
        %s701 = scalar_lea.vmem %s4, %s700
      $region60: #{db_head_forward.3} parent=51 // pred_fallthru
        _
      // Predicated region
      $region61: #{db_head_forward.3} parent=51 // pred_check
        %p702 = pneg %p181
      $region62: #{db_head_forward.3} parent=51 // pred_check_branch
        %704 = sbr.rel (%p702) target = $region64
      $region63: #{db_head_forward.3} parent=51 // pred_region
        %p705 = scmp.lt.s32.totalorder %s23, 1
        %s706 = scalar_select %p705, %s23, 1
        %s707 = scalar_lea.vmem %s5, %s706
      $region64: #{db_head_forward.3} parent=51 // pred_fallthru
        _
    $region52: #{db_head_forward.3} parent=5 // pred_fallthru
      _
  $region6: #{db_head_forward.3} parent=0 // loop_footer
    %s16 = sadd.s32 1, %s12
  $region7: #{db_head_forward.3} parent=0 // loop_footer_branch
    %11 = sbr.rel target = $region3
  $region8: #{db_head_forward.3} parent=0 // loop_exit
    _

// kernel: db_head_forward.4
$region0: #{db_head_forward.4}
  #allocation0 [shape = 'u32[]', space=smem, size = 0x4, offset = 0x4, fixed_abs, tag = 'smem constant byte address 0x4 - core index']
  #allocation1 [shape = 'u32[144,128]{1,0:T(1,128)}', space=vmem, size = 0x12000, scoped, tag = 'internal scratch']
  %s0 = inlined_call_operand.vmem [shape: f32[512,8], index: 0, kind: input, shape index: {}]
  %s1 = inlined_call_operand.vmem [shape: f32[1,8], index: 1, kind: input, shape index: {}]
  %s2 = inlined_call_operand.vmem [shape: f32[1,8], index: 2, kind: input, shape index: {}]
  %s3 = inlined_call_operand.vmem [shape: f32[8,32], index: 3, kind: input, shape index: {}]
  %s4 = inlined_call_operand.vmem [shape: f32[1,32], index: 4, kind: input, shape index: {}]
  %s5 = inlined_call_operand.vmem [shape: f32[512,32], index: 5, kind: output, shape index: {0}]
  %s6 = inlined_call_operand.vmem [shape: f32[2,1,32], index: 6, kind: output, shape index: {1}]
  %s7 = inlined_call_operand.vmem [shape: f32[2,1,32], index: 7, kind: output, shape index: {2}]
  %8 = xla_tuple %s5, %s6, %s7
  %s9 = sld [smem:[#allocation0]]
  $region73: #{db_head_forward.4} parent=0
    _
  %s11 = ssub.s32 1, %s9
  %s12 = scalar_select 0, %s11, %s9
  loop: start=0, step=1, limit=6
  $region2: #{db_head_forward.4} parent=0 // loop_pre_header
    _
  $region3: #{db_head_forward.4} parent=0 // loop_header
    %s14 = sphi 0, %s18
    %p15 = scmp.ge.s32.totalorder %s14, 6
    %s21 = sphi 0, %s33
    %s22 = sphi 0, %s29
    %s23 = sphi 0, %s21
    %s24 = sphi 0, %s22
    %s25 = sphi 0, %s23
    %s26 = sphi 0, %s24
    %s40 = sphi 0, %s42
    %s43 = sphi 0, %s40
    %s44 = sphi 0, %s43
    %s60 = sphi 0, %s44
    %s64 = sphi 0, %s64
    %s66 = sphi 0, %s64
    %s67 = sphi 0, %s66
    %s81 = sphi 0, %s67
    %s85 = sphi 0, %s85
    %s87 = sphi 0, %s85
    %s88 = sphi 0, %s87
    %s102 = sphi 0, %s88
    %s106 = sphi 0, %s106
    %s108 = sphi 0, %s106
    %s109 = sphi 0, %s108
    %s123 = sphi 0, %s109
    %s127 = sphi 0, %s127
    %s129 = sphi 0, %s127
    %s130 = sphi 0, %s129
    %s144 = sphi 0, %s130
    %s154 = sphi 0, %s156
    %s157 = sphi 0, %s154
    %s158 = sphi 0, %s157
    %s174 = sphi 0, %s158
    %s180 = sphi 0, %s182
    %s183 = sphi 0, %s180
    %s184 = sphi 0, %s183
    %s200 = sphi 0, %s184
    %s206 = sphi 0, %s208
    %s209 = sphi 0, %s206
    %s210 = sphi 0, %s209
    %s226 = sphi 0, %s210
  $region4: #{db_head_forward.4} parent=0 // loop_header_branch
    %17 = sbr.rel (%p15) target = $region8
  $region5: #{db_head_forward.4} parent=0 // loop_body
    %s19 = ssub.s32 %s14, 1
    %s20 = ssub.s32 %s14, 2
    %s27 = sadd.s32 1, %s22
    %p28 = scmp.ge.s32.totalorder %s27, 2
    %s29 = scalar_select %p28, 0, %s27
    %s30 = sadd.s32 1, %s21
    %s31 = scalar_select %p28, %s30, %s21
    %p32 = scmp.ge.s32.totalorder %s31, 2
    %s33 = scalar_select %p32, 0, %s31
    %s34 = smul.u32 %s21, 2
    %s35 = sadd.s32 %s34, %s22
    %s36 = smul.u32 %s33, 2
    %s37 = sadd.s32 %s36, %s29
    %s38 = ssub.s32 %s35, %s37
    %p39 = scmp.eq.s32.totalorder %s38, 0
    %s41 = sadd.s32 %s40, 1
    %s42 = scalar_select %p39, %s40, %s41
    %p45 = pneg %p39
    %p46 = scmp.eq.s32.totalorder %s14, 3
    %p47 = por %p45, %p46
    %p48 = scmp.ne.s32.totalorder %s40, %s43
    %p49 = scmp.eq.s32.totalorder %s14, 0
    %p50 = por %p48, %p49
    %p51 = scmp.ne.s32.totalorder %s40, %s43
    %p52 = scmp.eq.s32.totalorder %s19, 3
    %p53 = por %p51, %p52
    %p54 = scmp.ne.s32.totalorder %s43, %s44
    %p55 = scmp.eq.s32.totalorder %s19, 0
    %p56 = por %p54, %p55
    %p57 = scmp.ne.s32.totalorder %s43, %s44
    %p58 = scmp.eq.s32.totalorder %s20, 3
    %p59 = por %p57, %p58
    %p61 = scmp.ne.s32.totalorder %s44, %s60
    %p62 = scmp.eq.s32.totalorder %s20, 0
    %p63 = por %p61, %p62
    %s65 = sadd.s32 %s64, 1
    %p68 = scmp.eq.s32.totalorder %s14, 3
    %p69 = scmp.ne.s32.totalorder %s64, %s66
    %p70 = scmp.eq.s32.totalorder %s14, 0
    %p71 = por %p69, %p70
    %p72 = scmp.ne.s32.totalorder %s64, %s66
    %p73 = scmp.eq.s32.totalorder %s19, 3
    %p74 = por %p72, %p73
    %p75 = scmp.ne.s32.totalorder %s66, %s67
    %p76 = scmp.eq.s32.totalorder %s19, 0
    %p77 = por %p75, %p76
    %p78 = scmp.ne.s32.totalorder %s66, %s67
    %p79 = scmp.eq.s32.totalorder %s20, 3
    %p80 = por %p78, %p79
    %p82 = scmp.ne.s32.totalorder %s67, %s81
    %p83 = scmp.eq.s32.totalorder %s20, 0
    %p84 = por %p82, %p83
    %s86 = sadd.s32 %s85, 1
    %p89 = scmp.eq.s32.totalorder %s14, 3
    %p90 = scmp.ne.s32.totalorder %s85, %s87
    %p91 = scmp.eq.s32.totalorder %s14, 0
    %p92 = por %p90, %p91
    %p93 = scmp.ne.s32.totalorder %s85, %s87
    %p94 = scmp.eq.s32.totalorder %s19, 3
    %p95 = por %p93, %p94
    %p96 = scmp.ne.s32.totalorder %s87, %s88
    %p97 = scmp.eq.s32.totalorder %s19, 0
    %p98 = por %p96, %p97
    %p99 = scmp.ne.s32.totalorder %s87, %s88
    %p100 = scmp.eq.s32.totalorder %s20, 3
    %p101 = por %p99, %p100
    %p103 = scmp.ne.s32.totalorder %s88, %s102
    %p104 = scmp.eq.s32.totalorder %s20, 0
    %p105 = por %p103, %p104
    %s107 = sadd.s32 %s106, 1
    %p110 = scmp.eq.s32.totalorder %s14, 3
    %p111 = scmp.ne.s32.totalorder %s106, %s108
    %p112 = scmp.eq.s32.totalorder %s14, 0
    %p113 = por %p111, %p112
    %p114 = scmp.ne.s32.totalorder %s106, %s108
    %p115 = scmp.eq.s32.totalorder %s19, 3
    %p116 = por %p114, %p115
    %p117 = scmp.ne.s32.totalorder %s108, %s109
    %p118 = scmp.eq.s32.totalorder %s19, 0
    %p119 = por %p117, %p118
    %p120 = scmp.ne.s32.totalorder %s108, %s109
    %p121 = scmp.eq.s32.totalorder %s20, 3
    %p122 = por %p120, %p121
    %p124 = scmp.ne.s32.totalorder %s109, %s123
    %p125 = scmp.eq.s32.totalorder %s20, 0
    %p126 = por %p124, %p125
    %s128 = sadd.s32 %s127, 1
    %p131 = scmp.eq.s32.totalorder %s14, 3
    %p132 = scmp.ne.s32.totalorder %s127, %s129
    %p133 = scmp.eq.s32.totalorder %s14, 0
    %p134 = por %p132, %p133
    %p135 = scmp.ne.s32.totalorder %s127, %s129
    %p136 = scmp.eq.s32.totalorder %s19, 3
    %p137 = por %p135, %p136
    %p138 = scmp.ne.s32.totalorder %s129, %s130
    %p139 = scmp.eq.s32.totalorder %s19, 0
    %p140 = por %p138, %p139
    %p141 = scmp.ne.s32.totalorder %s129, %s130
    %p142 = scmp.eq.s32.totalorder %s20, 3
    %p143 = por %p141, %p142
    %p145 = scmp.ne.s32.totalorder %s130, %s144
    %p146 = scmp.eq.s32.totalorder %s20, 0
    %p147 = por %p145, %p146
    %s148 = smul.u32 %s21, 2
    %s149 = sadd.s32 %s148, %s22
    %s150 = smul.u32 %s33, 2
    %s151 = sadd.s32 %s150, %s29
    %s152 = ssub.s32 %s149, %s151
    %p153 = scmp.eq.s32.totalorder %s152, 0
    %s155 = sadd.s32 %s154, 1
    %s156 = scalar_select %p153, %s154, %s155
    %p159 = pneg %p153
    %p160 = scmp.eq.s32.totalorder %s14, 3
    %p161 = por %p159, %p160
    %p162 = scmp.ne.s32.totalorder %s154, %s157
    %p163 = scmp.eq.s32.totalorder %s14, 0
    %p164 = por %p162, %p163
    %p165 = scmp.ne.s32.totalorder %s154, %s157
    %p166 = scmp.eq.s32.totalorder %s19, 3
    %p167 = por %p165, %p166
    %p168 = scmp.ne.s32.totalorder %s157, %s158
    %p169 = scmp.eq.s32.totalorder %s19, 0
    %p170 = por %p168, %p169
    %p171 = scmp.ne.s32.totalorder %s157, %s158
    %p172 = scmp.eq.s32.totalorder %s20, 3
    %p173 = por %p171, %p172
    %p175 = scmp.ne.s32.totalorder %s158, %s174
    %p176 = scmp.eq.s32.totalorder %s20, 0
    %p177 = por %p175, %p176
    %s178 = ssub.s32 %s21, %s33
    %p179 = scmp.eq.s32.totalorder %s178, 0
    %s181 = sadd.s32 %s180, 1
    %s182 = scalar_select %p179, %s180, %s181
    %p185 = pneg %p179
    %p186 = scmp.eq.s32.totalorder %s14, 3
    %p187 = por %p185, %p186
    %p188 = scmp.ne.s32.totalorder %s180, %s183
    %p189 = scmp.eq.s32.totalorder %s14, 0
    %p190 = por %p188, %p189
    %p191 = scmp.ne.s32.totalorder %s180, %s183
    %p192 = scmp.eq.s32.totalorder %s19, 3
    %p193 = por %p191, %p192
    %p194 = scmp.ne.s32.totalorder %s183, %s184
    %p195 = scmp.eq.s32.totalorder %s19, 0
    %p196 = por %p194, %p195
    %p197 = scmp.ne.s32.totalorder %s183, %s184
    %p198 = scmp.eq.s32.totalorder %s20, 3
    %p199 = por %p197, %p198
    %p201 = scmp.ne.s32.totalorder %s184, %s200
    %p202 = scmp.eq.s32.totalorder %s20, 0
    %p203 = por %p201, %p202
    %s204 = ssub.s32 %s21, %s33
    %p205 = scmp.eq.s32.totalorder %s204, 0
    %s207 = sadd.s32 %s206, 1
    %s208 = scalar_select %p205, %s206, %s207
    %p211 = pneg %p205
    %p212 = scmp.eq.s32.totalorder %s14, 3
    %p213 = por %p211, %p212
    %p214 = scmp.ne.s32.totalorder %s206, %s209
    %p215 = scmp.eq.s32.totalorder %s14, 0
    %p216 = por %p214, %p215
    %p217 = scmp.ne.s32.totalorder %s206, %s209
    %p218 = scmp.eq.s32.totalorder %s19, 3
    %p219 = por %p217, %p218
    %p220 = scmp.ne.s32.totalorder %s209, %s210
    %p221 = scmp.eq.s32.totalorder %s19, 0
    %p222 = por %p220, %p221
    %p223 = scmp.ne.s32.totalorder %s209, %s210
    %p224 = scmp.eq.s32.totalorder %s20, 3
    %p225 = por %p223, %p224
    %p227 = scmp.ne.s32.totalorder %s210, %s226
    %p228 = scmp.eq.s32.totalorder %s20, 0
    %p229 = por %p227, %p228
    %p230 = scmp.le.s32.totalorder 1, %s14
    %p231 = scmp.lt.s32.totalorder %s14, 5
    %p232 = pnand %p230, %p231
    %p233 = pneg %p232
    // Predicated region
    $region9: #{db_head_forward.4} parent=5 // pred_check
      _
    $region10: #{db_head_forward.4} parent=5 // pred_check_branch
      %235 = sbr.rel (%p232) target = $region12
    $region11: #{db_head_forward.4} parent=5 // pred_region
      %s236 = ssub.s32 %s14, 1
      // Predicated region
      $region13: #{db_head_forward.4} parent=11 // pred_check
        %p237 = pneg %p77
      $region14: #{db_head_forward.4} parent=11 // pred_check_branch
        %239 = sbr.rel (%p237) target = $region16
      $region15: #{db_head_forward.4} parent=11 // pred_region
        _
      $region16: #{db_head_forward.4} parent=11 // pred_fallthru
        _
      // Predicated region
      $region17: #{db_head_forward.4} parent=11 // pred_check
        %p240 = pneg %p98
      $region18: #{db_head_forward.4} parent=11 // pred_check_branch
        %242 = sbr.rel (%p240) target = $region20
      $region19: #{db_head_forward.4} parent=11 // pred_region
        _
      $region20: #{db_head_forward.4} parent=11 // pred_fallthru
        _
      // Predicated region
      $region21: #{db_head_forward.4} parent=11 // pred_check
        %p243 = pneg %p119
      $region22: #{db_head_forward.4} parent=11 // pred_check_branch
        %245 = sbr.rel (%p243) target = $region24
      $region23: #{db_head_forward.4} parent=11 // pred_region
        _
      $region24: #{db_head_forward.4} parent=11 // pred_fallthru
        _
      // Predicated region
      $region25: #{db_head_forward.4} parent=11 // pred_check
        %p246 = pneg %p140
      $region26: #{db_head_forward.4} parent=11 // pred_check_branch
        %248 = sbr.rel (%p246) target = $region28
      $region27: #{db_head_forward.4} parent=11 // pred_region
        _
      $region28: #{db_head_forward.4} parent=11 // pred_fallthru
        _
    $region12: #{db_head_forward.4} parent=5 // pred_fallthru
      _
    %p249 = scmp.lt.s32.totalorder %s14, 4
    // Predicated region
    $region29: #{db_head_forward.4} parent=5 // pred_check
      %p250 = pneg %p249
    $region30: #{db_head_forward.4} parent=5 // pred_check_branch
      %252 = sbr.rel (%p250) target = $region32
    $region31: #{db_head_forward.4} parent=5 // pred_region
      // Predicated region
      $region33: #{db_head_forward.4} parent=31 // pred_check
        %p253 = pneg %p50
      $region34: #{db_head_forward.4} parent=31 // pred_check_branch
        %255 = sbr.rel (%p253) target = $region36
      $region35: #{db_head_forward.4} parent=31 // pred_region
        %s256 = smul.u32 %s21, 2
        %s257 = sadd.s32 %s256, %s22
        %s258 = smul.u32 16, %s257
        %p259 = scmp.lt.s32.totalorder %s258, 63
        %s260 = scalar_select %p259, %s258, 63
        %s261 = smul.addr %s260, 8
        %s262 = scalar_lea.vmem %s0, %s261
        %s263 = smul.u32 %s21, 2
        %s264 = sadd.s32 %s263, %s22
        %s265 = smul.u32 16, %s264
      $region36: #{db_head_forward.4} parent=31 // pred_fallthru
        _
    $region32: #{db_head_forward.4} parent=5 // pred_fallthru
      _
    %p266 = scmp.le.s32.totalorder 1, %s14
    %p267 = scmp.lt.s32.totalorder %s14, 5
    %p268 = pnand %p266, %p267
    %p269 = pneg %p268
    // Predicated region
    $region37: #{db_head_forward.4} parent=5 // pred_check
      _
    $region38: #{db_head_forward.4} parent=5 // pred_check_branch
      %271 = sbr.rel (%p268) target = $region40
    $region39: #{db_head_forward.4} parent=5 // pred_region
      %s272 = ssub.s32 %s14, 1
      %s273 = smul.u32 %s23, 2
      %s274 = sadd.s32 %s273, %s24
      %s275 = smul.u32 16, %s274
      %p276 = scmp.lt.s32.totalorder %s275, 63
      %s277 = scalar_select %p276, %s275, 63
      %s278 = smul.addr %s277, 8
      %s279 = scalar_lea.vmem %s0, %s278
      %p280 = pneg %p56
      %p281 = pneg %p53
      %p282 = pneg %p77
      %p283 = pneg %p74
      %p284 = pneg %p98
      %p285 = pneg %p95
      %p286 = pneg %p119
      %p287 = pneg %p116
      %p288 = pneg %p140
      %p289 = pneg %p137
      %p290 = pneg %p170
      %p291 = pneg %p167
      %s292 = smul.u32 %s23, 2
      %s293 = sadd.s32 %s292, %s24
      %s294 = smul.u32 16, %s293
      %p295 = scmp.lt.s32.totalorder %s294, 63
      %s296 = scalar_select %p295, %s294, 63
      %s297 = smul.addr %s296, 8
      %s298 = scalar_lea.vmem %s5, %s297
      %p299 = pneg %p196
      %p300 = pneg %p193
      %p301 = scmp.lt.s32.totalorder %s23, 1
      %s302 = scalar_select %p301, %s23, 1
      %s303 = scalar_lea.vmem %s6, %s302
      %p304 = pneg %p222
      %p305 = pneg %p219
      %p306 = scmp.lt.s32.totalorder %s23, 1
      %s307 = scalar_select %p306, %s23, 1
      %s308 = scalar_lea.vmem %s7, %s307
      %s309 = smul.u32 %s23, 2
      %s310 = sadd.s32 %s309, %s24
      %s311 = smul.u32 16, %s310
      %p312 = scmp.lt.s32.totalorder %s311, 63
      %s313 = scalar_select %p312, %s311, 63
      %s314 = smul.addr %s313, 8
      %s315 = scalar_lea.vmem %s0, %s314
      %s316 = smul.u32 %s23, 2
      %s317 = sadd.s32 %s316, %s24
      %s318 = smul.u32 16, %s317
      %s319 = smul.u32 %s23, 2
      %s320 = sadd.s32 %s319, %s24
      %s321 = smul.u32 16, %s320
      %p322 = scmp.lt.s32.totalorder %s321, 63
      %s323 = scalar_select %p322, %s321, 63
      %s324 = smul.addr %s323, 8
      %s325 = scalar_lea.vmem %s5, %s324
      %s326 = smul.u32 %s23, 2
      %s327 = sadd.s32 %s326, %s24
      %s328 = smul.u32 16, %s327
      %p329 = scmp.lt.s32.totalorder %s23, 1
      %s330 = scalar_select %p329, %s23, 1
      %s331 = scalar_lea.vmem %s6, %s330
      %p332 = scmp.lt.s32.totalorder %s23, 1
      %s333 = scalar_select %p332, %s23, 1
      %s334 = scalar_lea.vmem %s7, %s333
      %p335 = scmp.eq.s32.totalorder %s24, 0
      // Predicated region
      $region41: #{db_head_forward.4} parent=39 // pred_check
        %p336 = pneg %p335
      $region42: #{db_head_forward.4} parent=39 // pred_check_branch
        %338 = sbr.rel (%p336) target = $region44
      $region43: #{db_head_forward.4} parent=39 // pred_region
        %vm339 = vcmask 253952
        %340 = vst.msk [vmem:[%s331] sm:$0x1] %vm339, 0.0
        %341 = vst.msk [vmem:[%s334] sm:$0x1] %vm339, 0.0
      $region44: #{db_head_forward.4} parent=39 // pred_fallthru
        _
      %v342 = vld [vmem:[%s315] sm:$0xff]
      %v343 = vld [vmem:[%s315 + $0x8] sm:$0xff]
      %v344 = vld [vmem:[%s315 + $0x10] sm:$0xff]
      %v345 = vld [vmem:[%s315 + $0x18] sm:$0xff]
      %v346 = vld [vmem:[%s315 + $0x20] sm:$0xff]
      %v347 = vld [vmem:[%s315 + $0x28] sm:$0xff]
      %v348 = vld [vmem:[%s315 + $0x30] sm:$0xff]
      %v349 = vld [vmem:[%s315 + $0x38] sm:$0xff]
      %v350 = vld [vmem:[%s315 + $0x40] sm:$0xff]
      %v351 = vld [vmem:[%s315 + $0x48] sm:$0xff]
      %v352 = vld [vmem:[%s315 + $0x50] sm:$0xff]
      %v353 = vld [vmem:[%s315 + $0x58] sm:$0xff]
      %v354 = vld [vmem:[%s315 + $0x60] sm:$0xff]
      %v355 = vld [vmem:[%s315 + $0x68] sm:$0xff]
      %v356 = vld [vmem:[%s315 + $0x70] sm:$0xff]
      %v357 = vld [vmem:[%s315 + $0x78] sm:$0xff]
      %v358 = vld [vmem:[%s1] sm:$0x1]
      %v360 = vlaneseq
      %v361 = vshrl.u32 %v360, 7
      %v362 = vsub.s32 0, %v361
      %v363 = vrot.slane %v358, %v362
      %v365 = vmul.f32 %v342, %v363
      %v366 = vmul.f32 %v343, %v363
      %v367 = vmul.f32 %v344, %v363
      %v368 = vmul.f32 %v345, %v363
      %v369 = vmul.f32 %v346, %v363
      %v370 = vmul.f32 %v347, %v363
      %v371 = vmul.f32 %v348, %v363
      %v372 = vmul.f32 %v349, %v363
      %v373 = vmul.f32 %v350, %v363
      %v374 = vmul.f32 %v351, %v363
      %v375 = vmul.f32 %v352, %v363
      %v376 = vmul.f32 %v353, %v363
      %v377 = vmul.f32 %v354, %v363
      %v378 = vmul.f32 %v355, %v363
      %v379 = vmul.f32 %v356, %v363
      %v380 = vmul.f32 %v357, %v363
      %v381 = vld [vmem:[%s2] sm:$0x1]
      %v383 = vlaneseq
      %v384 = vshrl.u32 %v383, 7
      %v385 = vsub.s32 0, %v384
      %v386 = vrot.slane %v381, %v385
      %v388 = vadd.f32 %v365, %v386
      %v389 = vadd.f32 %v366, %v386
      %v390 = vadd.f32 %v367, %v386
      %v391 = vadd.f32 %v368, %v386
      %v392 = vadd.f32 %v369, %v386
      %v393 = vadd.f32 %v370, %v386
      %v394 = vadd.f32 %v371, %v386
      %v395 = vadd.f32 %v372, %v386
      %v396 = vadd.f32 %v373, %v386
      %v397 = vadd.f32 %v374, %v386
      %v398 = vadd.f32 %v375, %v386
      %v399 = vadd.f32 %v376, %v386
      %v400 = vadd.f32 %v377, %v386
      %v401 = vadd.f32 %v378, %v386
      %v402 = vadd.f32 %v379, %v386
      %v403 = vadd.f32 %v380, %v386
      %v404 = vmax.f32 %v388, 0.0
      %v405 = vmax.f32 %v389, 0.0
      %v406 = vmax.f32 %v390, 0.0
      %v407 = vmax.f32 %v391, 0.0
      %v408 = vmax.f32 %v392, 0.0
      %v409 = vmax.f32 %v393, 0.0
      %v410 = vmax.f32 %v394, 0.0
      %v411 = vmax.f32 %v395, 0.0
      %v412 = vmax.f32 %v396, 0.0
      %v413 = vmax.f32 %v397, 0.0
      %v414 = vmax.f32 %v398, 0.0
      %v415 = vmax.f32 %v399, 0.0
      %v416 = vmax.f32 %v400, 0.0
      %v417 = vmax.f32 %v401, 0.0
      %v418 = vmax.f32 %v402, 0.0
      %v419 = vmax.f32 %v403, 0.0
      %v420 = vld [vmem:[%s3] sm:$0xff]
      %v421 = vld [vmem:[%s4] sm:$0x1]
      %v423 = vlaneseq
      %v424 = vshrl.u32 %v423, 7
      %v425 = vsub.s32 0, %v424
      %v426 = vrot.slane %v421, %v425
      %vm428 = vcmask 64512
      %v430 = vsel %vm428, %v404, 0
      %v433 = vsel %vm428, %v405, 0
      %v436 = vsel %vm428, %v406, 0
      %v439 = vsel %vm428, %v407, 0
      %v442 = vsel %vm428, %v408, 0
      %v445 = vsel %vm428, %v409, 0
      %v448 = vsel %vm428, %v410, 0
      %v451 = vsel %vm428, %v411, 0
      %v454 = vsel %vm428, %v412, 0
      %v457 = vsel %vm428, %v413, 0
      %v460 = vsel %vm428, %v414, 0
      %v463 = vsel %vm428, %v415, 0
      %v466 = vsel %vm428, %v416, 0
      %v469 = vsel %vm428, %v417, 0
      %v472 = vsel %vm428, %v418, 0
      %v475 = vsel %vm428, %v419, 0
      %477 = vmatprep.subr.mxu0 0.0
      %478 = vmatpush1.msra.mxu0 %v420
      %479 = vmatprep.subr.mxu0 0.0
      %480 = vmatpush1.msra.mxu0 0.0
      %481 = vmatprep.subr.mxu0 0.0
      %482 = vmatpush1.msra.mxu0 0.0
      %483 = vmatprep.subr.mxu0 0.0
      %484 = vmatpush1.msra.mxu0 0.0
      %485 = vmatprep.subr.mxu0 0.0
      %486 = vmatpush1.msra.mxu0 0.0
      %487 = vmatprep.subr.mxu0 0.0
      %488 = vmatpush1.msra.mxu0 0.0
      %489 = vmatprep.subr.mxu0 0.0
      %490 = vmatpush1.msra.mxu0 0.0
      %491 = vmatprep.subr.mxu0 0.0
      %492 = vmatpush1.msra.mxu0 0.0
      %493 = vmatprep.subr.mxu0 0.0
      %494 = vmatpush1.msra.mxu0 0.0
      %495 = vmatprep.subr.mxu0 0.0
      %496 = vmatpush1.msra.mxu0 0.0
      %497 = vmatprep.subr.mxu0 0.0
      %498 = vmatpush1.msra.mxu0 0.0
      %499 = vmatprep.subr.mxu0 0.0
      %500 = vmatpush1.msra.mxu0 0.0
      %501 = vmatprep.subr.mxu0 0.0
      %502 = vmatpush1.msra.mxu0 0.0
      %503 = vmatprep.subr.mxu0 0.0
      %504 = vmatpush1.msra.mxu0 0.0
      %505 = vmatprep.subr.mxu0 0.0
      %506 = vmatpush1.msra.mxu0 0.0
      %507 = vmatprep.subr.mxu0 0.0
      %508 = vmatpush1.msra.mxu0 0.0
      %509 = vmatprep.subr.mxu0 0.0
      %510 = vmatpush1.msra.mxu0 0.0
      %511 = vmatprep.subr.mxu0 0.0
      %512 = vmatpush1.msra.mxu0 0.0
      %513 = vmatprep.subr.mxu0 0.0
      %514 = vmatpush1.msra.mxu0 0.0
      %515 = vmatprep.subr.mxu0 0.0
      %516 = vmatpush1.msra.mxu0 0.0
      %517 = vmatprep.subr.mxu0 0.0
      %518 = vmatpush1.msra.mxu0 0.0
      %519 = vmatprep.subr.mxu0 0.0
      %520 = vmatpush1.msra.mxu0 0.0
      %521 = vmatprep.subr.mxu0 0.0
      %522 = vmatpush1.msra.mxu0 0.0
      %523 = vmatprep.subr.mxu0 0.0
      %524 = vmatpush1.msra.mxu0 0.0
      %525 = vmatprep.subr.mxu0 0.0
      %526 = vmatpush1.msra.mxu0 0.0
      %527 = vmatprep.subr.mxu0 0.0
      %528 = vmatpush1.msra.mxu0 0.0
      %529 = vmatprep.subr.mxu0 0.0
      %530 = vmatpush1.msra.mxu0 0.0
      %531 = vmatprep.subr.mxu0 0.0
      %532 = vmatpush1.msra.mxu0 0.0
      %533 = vmatprep.subr.mxu0 0.0
      %534 = vmatpush1.msra.mxu0 0.0
      %535 = vmatprep.subr.mxu0 0.0
      %536 = vmatpush1.msra.mxu0 0.0
      %537 = vmatprep.subr.mxu0 0.0
      %538 = vmatpush1.msra.mxu0 0.0
      %539 = vmatprep.subr.mxu0 0.0
      %540 = vmatpush1.msra.mxu0 0.0
      %541 = vmatprep.mubr.f32.mxu0 0.0
      %542 = vmatmul.mubr.f32.gmra.mrb[0].mxu0 %v430
      %v543 = vpop.f32.mrb[0].mxu0
      %v544 = vadd.f32 %v426, %v543
      %v545 = vpop.f32.mrb[0].mxu0
      %546 = vmatprep.mubr.f32.mxu0 0.0
      %547 = vmatmul.mubr.f32.gmra.mrb[0].mxu0 %v433
      %v548 = vpop.f32.mrb[0].mxu0
      %v549 = vadd.f32 %v426, %v548
      %v550 = vpop.f32.mrb[0].mxu0
      %551 = vmatprep.mubr.f32.mxu0 0.0
      %552 = vmatmul.mubr.f32.gmra.mrb[0].mxu0 %v436
      %v553 = vpop.f32.mrb[0].mxu0
      %v554 = vadd.f32 %v426, %v553
      %v555 = vpop.f32.mrb[0].mxu0
      %556 = vmatprep.mubr.f32.mxu0 0.0
      %557 = vmatmul.mubr.f32.gmra.mrb[0].mxu0 %v439
      %v558 = vpop.f32.mrb[0].mxu0
      %v559 = vadd.f32 %v426, %v558
      %v560 = vpop.f32.mrb[0].mxu0
      %561 = vmatprep.mubr.f32.mxu0 0.0
      %562 = vmatmul.mubr.f32.gmra.mrb[0].mxu0 %v442
      %v563 = vpop.f32.mrb[0].mxu0
      %v564 = vadd.f32 %v426, %v563
      %v565 = vpop.f32.mrb[0].mxu0
      %566 = vmatprep.mubr.f32.mxu0 0.0
      %567 = vmatmul.mubr.f32.gmra.mrb[0].mxu0 %v445
      %v568 = vpop.f32.mrb[0].mxu0
      %v569 = vadd.f32 %v426, %v568
      %v570 = vpop.f32.mrb[0].mxu0
      %571 = vmatprep.mubr.f32.mxu0 0.0
      %572 = vmatmul.mubr.f32.gmra.mrb[0].mxu0 %v448
      %v573 = vpop.f32.mrb[0].mxu0
      %v574 = vadd.f32 %v426, %v573
      %v575 = vpop.f32.mrb[0].mxu0
      %576 = vmatprep.mubr.f32.mxu0 0.0
      %577 = vmatmul.mubr.f32.gmra.mrb[0].mxu0 %v451
      %v578 = vpop.f32.mrb[0].mxu0
      %v579 = vadd.f32 %v426, %v578
      %v580 = vpop.f32.mrb[0].mxu0
      %581 = vmatprep.mubr.f32.mxu0 0.0
      %582 = vmatmul.mubr.f32.gmra.mrb[0].mxu0 %v454
      %v583 = vpop.f32.mrb[0].mxu0
      %v584 = vadd.f32 %v426, %v583
      %v585 = vpop.f32.mrb[0].mxu0
      %586 = vmatprep.mubr.f32.mxu0 0.0
      %587 = vmatmul.mubr.f32.gmra.mrb[0].mxu0 %v457
      %v588 = vpop.f32.mrb[0].mxu0
      %v589 = vadd.f32 %v426, %v588
      %v590 = vpop.f32.mrb[0].mxu0
      %591 = vmatprep.mubr.f32.mxu0 0.0
      %592 = vmatmul.mubr.f32.gmra.mrb[0].mxu0 %v460
      %v593 = vpop.f32.mrb[0].mxu0
      %v594 = vadd.f32 %v426, %v593
      %v595 = vpop.f32.mrb[0].mxu0
      %596 = vmatprep.mubr.f32.mxu0 0.0
      %597 = vmatmul.mubr.f32.gmra.mrb[0].mxu0 %v463
      %v598 = vpop.f32.mrb[0].mxu0
      %v599 = vadd.f32 %v426, %v598
      %v600 = vpop.f32.mrb[0].mxu0
      %601 = vmatprep.mubr.f32.mxu0 0.0
      %602 = vmatmul.mubr.f32.gmra.mrb[0].mxu0 %v466
      %v603 = vpop.f32.mrb[0].mxu0
      %v604 = vadd.f32 %v426, %v603
      %v605 = vpop.f32.mrb[0].mxu0
      %606 = vmatprep.mubr.f32.mxu0 0.0
      %607 = vmatmul.mubr.f32.gmra.mrb[0].mxu0 %v469
      %v608 = vpop.f32.mrb[0].mxu0
      %v609 = vadd.f32 %v426, %v608
      %v610 = vpop.f32.mrb[0].mxu0
      %611 = vmatprep.mubr.f32.mxu0 0.0
      %612 = vmatmul.mubr.f32.gmra.mrb[0].mxu0 %v472
      %v613 = vpop.f32.mrb[0].mxu0
      %v614 = vadd.f32 %v426, %v613
      %v615 = vpop.f32.mrb[0].mxu0
      %616 = vmatprep.mubr.f32.mxu0 0.0
      %617 = vmatmul.mubr.f32.gmra.mrb[0].mxu0 %v475
      %v618 = vpop.f32.mrb[0].mxu0
      %v619 = vadd.f32 %v426, %v618
      %v620 = vpop.f32.mrb[0].mxu0
      %621 = vdwg.mxu0
      %vm622 = vcmask 261120
      %623 = vst.msk [vmem:[%s325] sm:$0xff] %vm622, %v544
      %624 = vst.msk [vmem:[%s325 + $0x8] sm:$0xff] %vm622, %v549
      %625 = vst.msk [vmem:[%s325 + $0x10] sm:$0xff] %vm622, %v554
      %626 = vst.msk [vmem:[%s325 + $0x18] sm:$0xff] %vm622, %v559
      %627 = vst.msk [vmem:[%s325 + $0x20] sm:$0xff] %vm622, %v564
      %628 = vst.msk [vmem:[%s325 + $0x28] sm:$0xff] %vm622, %v569
      %629 = vst.msk [vmem:[%s325 + $0x30] sm:$0xff] %vm622, %v574
      %630 = vst.msk [vmem:[%s325 + $0x38] sm:$0xff] %vm622, %v579
      %631 = vst.msk [vmem:[%s325 + $0x40] sm:$0xff] %vm622, %v584
      %632 = vst.msk [vmem:[%s325 + $0x48] sm:$0xff] %vm622, %v589
      %633 = vst.msk [vmem:[%s325 + $0x50] sm:$0xff] %vm622, %v594
      %634 = vst.msk [vmem:[%s325 + $0x58] sm:$0xff] %vm622, %v599
      %635 = vst.msk [vmem:[%s325 + $0x60] sm:$0xff] %vm622, %v604
      %636 = vst.msk [vmem:[%s325 + $0x68] sm:$0xff] %vm622, %v609
      %637 = vst.msk [vmem:[%s325 + $0x70] sm:$0xff] %vm622, %v614
      %638 = vst.msk [vmem:[%s325 + $0x78] sm:$0xff] %vm622, %v619
      %v639 = vld [vmem:[%s331] sm:$0x1]
      %v640 = vsel %vm622, %v544, 0.0
      %v641 = vsel %vm622, %v549, 0.0
      %v642 = vadd.f32 %v640, %v641
      %v643 = vsel %vm622, %v554, 0.0
      %v644 = vadd.f32 %v642, %v643
      %v645 = vsel %vm622, %v559, 0.0
      %v646 = vadd.f32 %v644, %v645
      %v647 = vsel %vm622, %v564, 0.0
      %v648 = vadd.f32 %v646, %v647
      %v649 = vsel %vm622, %v569, 0.0
      %v650 = vadd.f32 %v648, %v649
      %v651 = vsel %vm622, %v574, 0.0
      %v652 = vadd.f32 %v650, %v651
      %v653 = vsel %vm622, %v579, 0.0
      %v654 = vadd.f32 %v652, %v653
      %v655 = vsel %vm622, %v584, 0.0
      %v656 = vadd.f32 %v654, %v655
      %v657 = vsel %vm622, %v589, 0.0
      %v658 = vadd.f32 %v656, %v657
      %v659 = vsel %vm622, %v594, 0.0
      %v660 = vadd.f32 %v658, %v659
      %v661 = vsel %vm622, %v599, 0.0
      %v662 = vadd.f32 %v660, %v661
      %v663 = vsel %vm622, %v604, 0.0
      %v664 = vadd.f32 %v662, %v663
      %v665 = vsel %vm622, %v609, 0.0
      %v666 = vadd.f32 %v664, %v665
      %v667 = vsel %vm622, %v614, 0.0
      %v668 = vadd.f32 %v666, %v667
      %v669 = vsel %vm622, %v619, 0.0
      %v670 = vadd.f32 %v668, %v669
      %v671 = vrot.slane %v670, 4
      %v672 = vadd.f32 %v670, %v671
      %v673 = vrot.slane %v672, 2
      %v674 = vadd.f32 %v672, %v673
      %v675 = vrot.slane %v674, 1
      %v676 = vadd.f32 %v674, %v675
      %v677 = vadd.f32 %v639, %v676
      %vm678 = vcmask 253952
      %679 = vst.msk [vmem:[%s331] sm:$0x1] %vm678, %v677
      %v680 = vld [vmem:[%s334] sm:$0x1]
      %v681 = vmul.f32 %v544, %v544
      %v682 = vmul.f32 %v549, %v549
      %v683 = vmul.f32 %v554, %v554
      %v684 = vmul.f32 %v559, %v559
      %v685 = vmul.f32 %v564, %v564
      %v686 = vmul.f32 %v569, %v569
      %v687 = vmul.f32 %v574, %v574
      %v688 = vmul.f32 %v579, %v579
      %v689 = vmul.f32 %v584, %v584
      %v690 = vmul.f32 %v589, %v589
      %v691 = vmul.f32 %v594, %v594
      %v692 = vmul.f32 %v599, %v599
      %v693 = vmul.f32 %v604, %v604
      %v694 = vmul.f32 %v609, %v609
      %v695 = vmul.f32 %v614, %v614
      %v696 = vmul.f32 %v619, %v619
      %v697 = vsel %vm622, %v681, 0.0
      %v698 = vsel %vm622, %v682, 0.0
      %v699 = vadd.f32 %v697, %v698
      %v700 = vsel %vm622, %v683, 0.0
      %v701 = vadd.f32 %v699, %v700
      %v702 = vsel %vm622, %v684, 0.0
      %v703 = vadd.f32 %v701, %v702
      %v704 = vsel %vm622, %v685, 0.0
      %v705 = vadd.f32 %v703, %v704
      %v706 = vsel %vm622, %v686, 0.0
      %v707 = vadd.f32 %v705, %v706
      %v708 = vsel %vm622, %v687, 0.0
      %v709 = vadd.f32 %v707, %v708
      %v710 = vsel %vm622, %v688, 0.0
      %v711 = vadd.f32 %v709, %v710
      %v712 = vsel %vm622, %v689, 0.0
      %v713 = vadd.f32 %v711, %v712
      %v714 = vsel %vm622, %v690, 0.0
      %v715 = vadd.f32 %v713, %v714
      %v716 = vsel %vm622, %v691, 0.0
      %v717 = vadd.f32 %v715, %v716
      %v718 = vsel %vm622, %v692, 0.0
      %v719 = vadd.f32 %v717, %v718
      %v720 = vsel %vm622, %v693, 0.0
      %v721 = vadd.f32 %v719, %v720
      %v722 = vsel %vm622, %v694, 0.0
      %v723 = vadd.f32 %v721, %v722
      %v724 = vsel %vm622, %v695, 0.0
      %v725 = vadd.f32 %v723, %v724
      %v726 = vsel %vm622, %v696, 0.0
      %v727 = vadd.f32 %v725, %v726
      %v728 = vrot.slane %v727, 4
      %v729 = vadd.f32 %v727, %v728
      %v730 = vrot.slane %v729, 2
      %v731 = vadd.f32 %v729, %v730
      %v732 = vrot.slane %v731, 1
      %v733 = vadd.f32 %v731, %v732
      %v734 = vadd.f32 %v680, %v733
      %735 = vst.msk [vmem:[%s334] sm:$0x1] %vm678, %v734
      %s736 = smul.u32 %s23, 2
      %s737 = sadd.s32 %s736, %s24
      %s738 = smul.u32 16, %s737
      %p739 = scmp.lt.s32.totalorder %s738, 63
      %s740 = scalar_select %p739, %s738, 63
      %s741 = smul.addr %s740, 8
      %s742 = scalar_lea.vmem %s5, %s741
      %p743 = scmp.lt.s32.totalorder %s23, 1
      %s744 = scalar_select %p743, %s23, 1
      %s745 = scalar_lea.vmem %s6, %s744
      %p746 = scmp.lt.s32.totalorder %s23, 1
      %s747 = scalar_select %p746, %s23, 1
      %s748 = scalar_lea.vmem %s7, %s747
      // Predicated region
      $region45: #{db_head_forward.4} parent=39 // pred_check
        %p749 = pneg %p167
      $region46: #{db_head_forward.4} parent=39 // pred_check_branch
        %751 = sbr.rel (%p749) target = $region48
      $region47: #{db_head_forward.4} parent=39 // pred_region
        %s752 = smul.u32 %s23, 2
        %s753 = sadd.s32 %s752, %s24
        %s754 = smul.u32 16, %s753
      $region48: #{db_head_forward.4} parent=39 // pred_fallthru
        _
      // Predicated region
      $region49: #{db_head_forward.4} parent=39 // pred_check
        %p755 = pneg %p193
      $region50: #{db_head_forward.4} parent=39 // pred_check_branch
        %757 = sbr.rel (%p755) target = $region52
      $region51: #{db_head_forward.4} parent=39 // pred_region
        _
      $region52: #{db_head_forward.4} parent=39 // pred_fallthru
        _
      // Predicated region
      $region53: #{db_head_forward.4} parent=39 // pred_check
        %p758 = pneg %p219
      $region54: #{db_head_forward.4} parent=39 // pred_check_branch
        %760 = sbr.rel (%p758) target = $region56
      $region55: #{db_head_forward.4} parent=39 // pred_region
        _
      $region56: #{db_head_forward.4} parent=39 // pred_fallthru
        _
    $region40: #{db_head_forward.4} parent=5 // pred_fallthru
      _
    %p761 = scmp.le.s32.totalorder 2, %s14
    // Predicated region
    $region57: #{db_head_forward.4} parent=5 // pred_check
      %p762 = pneg %p761
    $region58: #{db_head_forward.4} parent=5 // pred_check_branch
      %764 = sbr.rel (%p762) target = $region60
    $region59: #{db_head_forward.4} parent=5 // pred_region
      %s765 = ssub.s32 %s14, 2
      // Predicated region
      $region61: #{db_head_forward.4} parent=59 // pred_check
        %p766 = pneg %p173
      $region62: #{db_head_forward.4} parent=59 // pred_check_branch
        %768 = sbr.rel (%p766) target = $region64
      $region63: #{db_head_forward.4} parent=59 // pred_region
        %s769 = smul.u32 %s25, 2
        %s770 = sadd.s32 %s769, %s26
        %s771 = smul.u32 16, %s770
        %p772 = scmp.lt.s32.totalorder %s771, 63
        %s773 = scalar_select %p772, %s771, 63
        %s774 = smul.addr %s773, 8
        %s775 = scalar_lea.vmem %s5, %s774
      $region64: #{db_head_forward.4} parent=59 // pred_fallthru
        _
      // Predicated region
      $region65: #{db_head_forward.4} parent=59 // pred_check
        %p776 = pneg %p199
      $region66: #{db_head_forward.4} parent=59 // pred_check_branch
        %778 = sbr.rel (%p776) target = $region68
      $region67: #{db_head_forward.4} parent=59 // pred_region
        %p779 = scmp.lt.s32.totalorder %s25, 1
        %s780 = scalar_select %p779, %s25, 1
        %s781 = scalar_lea.vmem %s6, %s780
      $region68: #{db_head_forward.4} parent=59 // pred_fallthru
        _
      // Predicated region
      $region69: #{db_head_forward.4} parent=59 // pred_check
        %p782 = pneg %p225
      $region70: #{db_head_forward.4} parent=59 // pred_check_branch
        %784 = sbr.rel (%p782) target = $region72
      $region71: #{db_head_forward.4} parent=59 // pred_region
        %p785 = scmp.lt.s32.totalorder %s25, 1
        %s786 = scalar_select %p785, %s25, 1
        %s787 = scalar_lea.vmem %s7, %s786
      $region72: #{db_head_forward.4} parent=59 // pred_fallthru
        _
    $region60: #{db_head_forward.4} parent=5 // pred_fallthru
      _
  $region6: #{db_head_forward.4} parent=0 // loop_footer
    %s18 = sadd.s32 1, %s14
  $region7: #{db_head_forward.4} parent=0 // loop_footer_branch
    %13 = sbr.rel target = $region3
  $region8: #{db_head_forward.4} parent=0 // loop_exit
    _

// kernel: db_head_forward.5
$region0: #{db_head_forward.5}
  #allocation0 [shape = 'u32[]', space=smem, size = 0x4, offset = 0x4, fixed_abs, tag = 'smem constant byte address 0x4 - core index']
  #allocation1 [shape = 'u32[144,128]{1,0:T(1,128)}', space=vmem, size = 0x12000, scoped, tag = 'internal scratch']
  %s0 = inlined_call_operand.vmem [shape: f32[512,32], index: 0, kind: input, shape index: {}]
  %s1 = inlined_call_operand.vmem [shape: f32[1,32], index: 1, kind: input, shape index: {}]
  %s2 = inlined_call_operand.vmem [shape: f32[1,32], index: 2, kind: input, shape index: {}]
  %s3 = inlined_call_operand.vmem [shape: f32[32,32], index: 3, kind: input, shape index: {}]
  %s4 = inlined_call_operand.vmem [shape: f32[1,32], index: 4, kind: input, shape index: {}]
  %s5 = inlined_call_operand.vmem [shape: f32[512,48], index: 5, kind: output, shape index: {}]
  %s6 = sld [smem:[#allocation0]]
  $region53: #{db_head_forward.5} parent=0
    _
  %s8 = ssub.s32 1, %s6
  %s9 = scalar_select 0, %s8, %s6
  loop: start=0, step=1, limit=6
  $region2: #{db_head_forward.5} parent=0 // loop_pre_header
    _
  $region3: #{db_head_forward.5} parent=0 // loop_header
    %s11 = sphi 0, %s15
    %p12 = scmp.ge.s32.totalorder %s11, 6
    %s21 = sphi 0, %s23
    %s24 = sphi 0, %s21
    %s25 = sphi 0, %s24
    %s41 = sphi 0, %s25
    %s45 = sphi 0, %s45
    %s47 = sphi 0, %s45
    %s48 = sphi 0, %s47
    %s62 = sphi 0, %s48
    %s66 = sphi 0, %s66
    %s68 = sphi 0, %s66
    %s69 = sphi 0, %s68
    %s83 = sphi 0, %s69
    %s87 = sphi 0, %s87
    %s89 = sphi 0, %s87
    %s90 = sphi 0, %s89
    %s104 = sphi 0, %s90
    %s108 = sphi 0, %s108
    %s110 = sphi 0, %s108
    %s111 = sphi 0, %s110
    %s125 = sphi 0, %s111
    %s131 = sphi 0, %s133
    %s134 = sphi 0, %s131
    %s135 = sphi 0, %s134
    %s151 = sphi 0, %s135
  $region4: #{db_head_forward.5} parent=0 // loop_header_branch
    %14 = sbr.rel (%p12) target = $region8
  $region5: #{db_head_forward.5} parent=0 // loop_body
    %s16 = ssub.s32 %s11, 1
    %s17 = ssub.s32 %s11, 2
    %s18 = sadd.s32 %s11, 1
    %s19 = ssub.s32 %s11, %s18
    %p20 = scmp.eq.s32.totalorder %s19, 0
    %s22 = sadd.s32 %s21, 1
    %s23 = scalar_select %p20, %s21, %s22
    %p26 = pneg %p20
    %p27 = scmp.eq.s32.totalorder %s11, 3
    %p28 = por %p26, %p27
    %p29 = scmp.ne.s32.totalorder %s21, %s24
    %p30 = scmp.eq.s32.totalorder %s11, 0
    %p31 = por %p29, %p30
    %p32 = scmp.ne.s32.totalorder %s21, %s24
    %p33 = scmp.eq.s32.totalorder %s16, 3
    %p34 = por %p32, %p33
    %p35 = scmp.ne.s32.totalorder %s24, %s25
    %p36 = scmp.eq.s32.totalorder %s16, 0
    %p37 = por %p35, %p36
    %p38 = scmp.ne.s32.totalorder %s24, %s25
    %p39 = scmp.eq.s32.totalorder %s17, 3
    %p40 = por %p38, %p39
    %p42 = scmp.ne.s32.totalorder %s25, %s41
    %p43 = scmp.eq.s32.totalorder %s17, 0
    %p44 = por %p42, %p43
    %s46 = sadd.s32 %s45, 1
    %p49 = scmp.eq.s32.totalorder %s11, 3
    %p50 = scmp.ne.s32.totalorder %s45, %s47
    %p51 = scmp.eq.s32.totalorder %s11, 0
    %p52 = por %p50, %p51
    %p53 = scmp.ne.s32.totalorder %s45, %s47
    %p54 = scmp.eq.s32.totalorder %s16, 3
    %p55 = por %p53, %p54
    %p56 = scmp.ne.s32.totalorder %s47, %s48
    %p57 = scmp.eq.s32.totalorder %s16, 0
    %p58 = por %p56, %p57
    %p59 = scmp.ne.s32.totalorder %s47, %s48
    %p60 = scmp.eq.s32.totalorder %s17, 3
    %p61 = por %p59, %p60
    %p63 = scmp.ne.s32.totalorder %s48, %s62
    %p64 = scmp.eq.s32.totalorder %s17, 0
    %p65 = por %p63, %p64
    %s67 = sadd.s32 %s66, 1
    %p70 = scmp.eq.s32.totalorder %s11, 3
    %p71 = scmp.ne.s32.totalorder %s66, %s68
    %p72 = scmp.eq.s32.totalorder %s11, 0
    %p73 = por %p71, %p72
    %p74 = scmp.ne.s32.totalorder %s66, %s68
    %p75 = scmp.eq.s32.totalorder %s16, 3
    %p76 = por %p74, %p75
    %p77 = scmp.ne.s32.totalorder %s68, %s69
    %p78 = scmp.eq.s32.totalorder %s16, 0
    %p79 = por %p77, %p78
    %p80 = scmp.ne.s32.totalorder %s68, %s69
    %p81 = scmp.eq.s32.totalorder %s17, 3
    %p82 = por %p80, %p81
    %p84 = scmp.ne.s32.totalorder %s69, %s83
    %p85 = scmp.eq.s32.totalorder %s17, 0
    %p86 = por %p84, %p85
    %s88 = sadd.s32 %s87, 1
    %p91 = scmp.eq.s32.totalorder %s11, 3
    %p92 = scmp.ne.s32.totalorder %s87, %s89
    %p93 = scmp.eq.s32.totalorder %s11, 0
    %p94 = por %p92, %p93
    %p95 = scmp.ne.s32.totalorder %s87, %s89
    %p96 = scmp.eq.s32.totalorder %s16, 3
    %p97 = por %p95, %p96
    %p98 = scmp.ne.s32.totalorder %s89, %s90
    %p99 = scmp.eq.s32.totalorder %s16, 0
    %p100 = por %p98, %p99
    %p101 = scmp.ne.s32.totalorder %s89, %s90
    %p102 = scmp.eq.s32.totalorder %s17, 3
    %p103 = por %p101, %p102
    %p105 = scmp.ne.s32.totalorder %s90, %s104
    %p106 = scmp.eq.s32.totalorder %s17, 0
    %p107 = por %p105, %p106
    %s109 = sadd.s32 %s108, 1
    %p112 = scmp.eq.s32.totalorder %s11, 3
    %p113 = scmp.ne.s32.totalorder %s108, %s110
    %p114 = scmp.eq.s32.totalorder %s11, 0
    %p115 = por %p113, %p114
    %p116 = scmp.ne.s32.totalorder %s108, %s110
    %p117 = scmp.eq.s32.totalorder %s16, 3
    %p118 = por %p116, %p117
    %p119 = scmp.ne.s32.totalorder %s110, %s111
    %p120 = scmp.eq.s32.totalorder %s16, 0
    %p121 = por %p119, %p120
    %p122 = scmp.ne.s32.totalorder %s110, %s111
    %p123 = scmp.eq.s32.totalorder %s17, 3
    %p124 = por %p122, %p123
    %p126 = scmp.ne.s32.totalorder %s111, %s125
    %p127 = scmp.eq.s32.totalorder %s17, 0
    %p128 = por %p126, %p127
    %s129 = ssub.s32 %s11, %s18
    %p130 = scmp.eq.s32.totalorder %s129, 0
    %s132 = sadd.s32 %s131, 1
    %s133 = scalar_select %p130, %s131, %s132
    %p136 = pneg %p130
    %p137 = scmp.eq.s32.totalorder %s11, 3
    %p138 = por %p136, %p137
    %p139 = scmp.ne.s32.totalorder %s131, %s134
    %p140 = scmp.eq.s32.totalorder %s11, 0
    %p141 = por %p139, %p140
    %p142 = scmp.ne.s32.totalorder %s131, %s134
    %p143 = scmp.eq.s32.totalorder %s16, 3
    %p144 = por %p142, %p143
    %p145 = scmp.ne.s32.totalorder %s134, %s135
    %p146 = scmp.eq.s32.totalorder %s16, 0
    %p147 = por %p145, %p146
    %p148 = scmp.ne.s32.totalorder %s134, %s135
    %p149 = scmp.eq.s32.totalorder %s17, 3
    %p150 = por %p148, %p149
    %p152 = scmp.ne.s32.totalorder %s135, %s151
    %p153 = scmp.eq.s32.totalorder %s17, 0
    %p154 = por %p152, %p153
    %p155 = scmp.le.s32.totalorder 1, %s11
    %p156 = scmp.lt.s32.totalorder %s11, 5
    %p157 = pnand %p155, %p156
    %p158 = pneg %p157
    // Predicated region
    $region9: #{db_head_forward.5} parent=5 // pred_check
      _
    $region10: #{db_head_forward.5} parent=5 // pred_check_branch
      %160 = sbr.rel (%p157) target = $region12
    $region11: #{db_head_forward.5} parent=5 // pred_region
      %s161 = ssub.s32 %s11, 1
      // Predicated region
      $region13: #{db_head_forward.5} parent=11 // pred_check
        %p162 = pneg %p58
      $region14: #{db_head_forward.5} parent=11 // pred_check_branch
        %164 = sbr.rel (%p162) target = $region16
      $region15: #{db_head_forward.5} parent=11 // pred_region
        _
      $region16: #{db_head_forward.5} parent=11 // pred_fallthru
        _
      // Predicated region
      $region17: #{db_head_forward.5} parent=11 // pred_check
        %p165 = pneg %p79
      $region18: #{db_head_forward.5} parent=11 // pred_check_branch
        %167 = sbr.rel (%p165) target = $region20
      $region19: #{db_head_forward.5} parent=11 // pred_region
        _
      $region20: #{db_head_forward.5} parent=11 // pred_fallthru
        _
      // Predicated region
      $region21: #{db_head_forward.5} parent=11 // pred_check
        %p168 = pneg %p100
      $region22: #{db_head_forward.5} parent=11 // pred_check_branch
        %170 = sbr.rel (%p168) target = $region24
      $region23: #{db_head_forward.5} parent=11 // pred_region
        _
      $region24: #{db_head_forward.5} parent=11 // pred_fallthru
        _
      // Predicated region
      $region25: #{db_head_forward.5} parent=11 // pred_check
        %p171 = pneg %p121
      $region26: #{db_head_forward.5} parent=11 // pred_check_branch
        %173 = sbr.rel (%p171) target = $region28
      $region27: #{db_head_forward.5} parent=11 // pred_region
        _
      $region28: #{db_head_forward.5} parent=11 // pred_fallthru
        _
    $region12: #{db_head_forward.5} parent=5 // pred_fallthru
      _
    %p174 = scmp.lt.s32.totalorder %s11, 4
    // Predicated region
    $region29: #{db_head_forward.5} parent=5 // pred_check
      %p175 = pneg %p174
    $region30: #{db_head_forward.5} parent=5 // pred_check_branch
      %177 = sbr.rel (%p175) target = $region32
    $region31: #{db_head_forward.5} parent=5 // pred_region
      // Predicated region
      $region33: #{db_head_forward.5} parent=31 // pred_check
        %p178 = pneg %p31
      $region34: #{db_head_forward.5} parent=31 // pred_check_branch
        %180 = sbr.rel (%p178) target = $region36
      $region35: #{db_head_forward.5} parent=31 // pred_region
        %s181 = smul.u32 16, %s11
        %p182 = scmp.lt.s32.totalorder %s181, 63
        %s183 = scalar_select %p182, %s181, 63
        %s184 = smul.addr %s183, 8
        %s185 = scalar_lea.vmem %s0, %s184
        %s186 = smul.u32 16, %s11
      $region36: #{db_head_forward.5} parent=31 // pred_fallthru
        _
    $region32: #{db_head_forward.5} parent=5 // pred_fallthru
      _
    %p187 = scmp.le.s32.totalorder 1, %s11
    %p188 = scmp.lt.s32.totalorder %s11, 5
    %p189 = pnand %p187, %p188
    %p190 = pneg %p189
    // Predicated region
    $region37: #{db_head_forward.5} parent=5 // pred_check
      _
    $region38: #{db_head_forward.5} parent=5 // pred_check_branch
      %192 = sbr.rel (%p189) target = $region40
    $region39: #{db_head_forward.5} parent=5 // pred_region
      %s193 = ssub.s32 %s11, 1
      %s194 = smul.u32 16, %s16
      %p195 = scmp.lt.s32.totalorder %s194, 63
      %s196 = scalar_select %p195, %s194, 63
      %s197 = smul.addr %s196, 8
      %s198 = scalar_lea.vmem %s0, %s197
      %p199 = pneg %p37
      %p200 = pneg %p34
      %p201 = pneg %p58
      %p202 = pneg %p55
      %p203 = pneg %p79
      %p204 = pneg %p76
      %p205 = pneg %p100
      %p206 = pneg %p97
      %p207 = pneg %p121
      %p208 = pneg %p118
      %p209 = pneg %p147
      %p210 = pneg %p144
      %s211 = smul.u32 16, %s16
      %p212 = scmp.lt.s32.totalorder %s211, 63
      %s213 = scalar_select %p212, %s211, 63
      %s214 = smul.addr %s213, 8
      %s215 = scalar_lea.vmem %s5, %s214
      %s216 = smul.u32 16, %s16
      %p217 = scmp.lt.s32.totalorder %s216, 63
      %s218 = scalar_select %p217, %s216, 63
      %s219 = smul.addr %s218, 8
      %s220 = scalar_lea.vmem %s0, %s219
      %s221 = smul.u32 16, %s16
      %s222 = smul.u32 16, %s16
      %p223 = scmp.lt.s32.totalorder %s222, 63
      %s224 = scalar_select %p223, %s222, 63
      %s225 = smul.addr %s224, 8
      %s226 = scalar_lea.vmem %s5, %s225
      %s227 = smul.u32 16, %s16
      %v228 = vld [vmem:[%s220] sm:$0xff]
      %v229 = vld [vmem:[%s220 + $0x8] sm:$0xff]
      %v230 = vld [vmem:[%s220 + $0x10] sm:$0xff]
      %v231 = vld [vmem:[%s220 + $0x18] sm:$0xff]
      %v232 = vld [vmem:[%s220 + $0x20] sm:$0xff]
      %v233 = vld [vmem:[%s220 + $0x28] sm:$0xff]
      %v234 = vld [vmem:[%s220 + $0x30] sm:$0xff]
      %v235 = vld [vmem:[%s220 + $0x38] sm:$0xff]
      %v236 = vld [vmem:[%s220 + $0x40] sm:$0xff]
      %v237 = vld [vmem:[%s220 + $0x48] sm:$0xff]
      %v238 = vld [vmem:[%s220 + $0x50] sm:$0xff]
      %v239 = vld [vmem:[%s220 + $0x58] sm:$0xff]
      %v240 = vld [vmem:[%s220 + $0x60] sm:$0xff]
      %v241 = vld [vmem:[%s220 + $0x68] sm:$0xff]
      %v242 = vld [vmem:[%s220 + $0x70] sm:$0xff]
      %v243 = vld [vmem:[%s220 + $0x78] sm:$0xff]
      %v244 = vld [vmem:[%s1] sm:$0x1]
      %v246 = vlaneseq
      %v247 = vshrl.u32 %v246, 7
      %v248 = vsub.s32 0, %v247
      %v249 = vrot.slane %v244, %v248
      %v251 = vmul.f32 %v228, %v249
      %v252 = vmul.f32 %v229, %v249
      %v253 = vmul.f32 %v230, %v249
      %v254 = vmul.f32 %v231, %v249
      %v255 = vmul.f32 %v232, %v249
      %v256 = vmul.f32 %v233, %v249
      %v257 = vmul.f32 %v234, %v249
      %v258 = vmul.f32 %v235, %v249
      %v259 = vmul.f32 %v236, %v249
      %v260 = vmul.f32 %v237, %v249
      %v261 = vmul.f32 %v238, %v249
      %v262 = vmul.f32 %v239, %v249
      %v263 = vmul.f32 %v240, %v249
      %v264 = vmul.f32 %v241, %v249
      %v265 = vmul.f32 %v242, %v249
      %v266 = vmul.f32 %v243, %v249
      %v267 = vld [vmem:[%s2] sm:$0x1]
      %v269 = vlaneseq
      %v270 = vshrl.u32 %v269, 7
      %v271 = vsub.s32 0, %v270
      %v272 = vrot.slane %v267, %v271
      %v274 = vadd.f32 %v251, %v272
      %v275 = vadd.f32 %v252, %v272
      %v276 = vadd.f32 %v253, %v272
      %v277 = vadd.f32 %v254, %v272
      %v278 = vadd.f32 %v255, %v272
      %v279 = vadd.f32 %v256, %v272
      %v280 = vadd.f32 %v257, %v272
      %v281 = vadd.f32 %v258, %v272
      %v282 = vadd.f32 %v259, %v272
      %v283 = vadd.f32 %v260, %v272
      %v284 = vadd.f32 %v261, %v272
      %v285 = vadd.f32 %v262, %v272
      %v286 = vadd.f32 %v263, %v272
      %v287 = vadd.f32 %v264, %v272
      %v288 = vadd.f32 %v265, %v272
      %v289 = vadd.f32 %v266, %v272
      %v290 = vmax.f32 %v274, 0.0
      %v291 = vmax.f32 %v275, 0.0
      %v292 = vmax.f32 %v276, 0.0
      %v293 = vmax.f32 %v277, 0.0
      %v294 = vmax.f32 %v278, 0.0
      %v295 = vmax.f32 %v279, 0.0
      %v296 = vmax.f32 %v280, 0.0
      %v297 = vmax.f32 %v281, 0.0
      %v298 = vmax.f32 %v282, 0.0
      %v299 = vmax.f32 %v283, 0.0
      %v300 = vmax.f32 %v284, 0.0
      %v301 = vmax.f32 %v285, 0.0
      %v302 = vmax.f32 %v286, 0.0
      %v303 = vmax.f32 %v287, 0.0
      %v304 = vmax.f32 %v288, 0.0
      %v305 = vmax.f32 %v289, 0.0
      %v306 = vld [vmem:[%s3] sm:$0xff]
      %v307 = vld [vmem:[%s3 + $0x8] sm:$0xff]
      %v308 = vld [vmem:[%s3 + $0x10] sm:$0xff]
      %v309 = vld [vmem:[%s3 + $0x18] sm:$0xff]
      %v310 = vld [vmem:[%s4] sm:$0x1]
      %v312 = vlaneseq
      %v313 = vshrl.u32 %v312, 7
      %v314 = vsub.s32 0, %v313
      %v315 = vrot.slane %v310, %v314
      %vm317 = vcmask 261120
      %v319 = vsel %vm317, %v290, 0
      %v322 = vsel %vm317, %v291, 0
      %v325 = vsel %vm317, %v292, 0
      %v328 = vsel %vm317, %v293, 0
      %v331 = vsel %vm317, %v294, 0
      %v334 = vsel %vm317, %v295, 0
      %v337 = vsel %vm317, %v296, 0
      %v340 = vsel %vm317, %v297, 0
      %v343 = vsel %vm317, %v298, 0
      %v346 = vsel %vm317, %v299, 0
      %v349 = vsel %vm317, %v300, 0
      %v352 = vsel %vm317, %v301, 0
      %v355 = vsel %vm317, %v302, 0
      %v358 = vsel %vm317, %v303, 0
      %v361 = vsel %vm317, %v304, 0
      %v364 = vsel %vm317, %v305, 0
      %366 = vmatprep.subr.mxu0 0.0
      %367 = vmatpush1.msra.mxu0 %v306
      %368 = vmatprep.subr.mxu0 0.0
      %369 = vmatpush1.msra.mxu0 %v307
      %370 = vmatprep.subr.mxu0 0.0
      %371 = vmatpush1.msra.mxu0 %v308
      %372 = vmatprep.subr.mxu0 0.0
      %373 = vmatpush1.msra.mxu0 %v309
      %374 = vmatprep.subr.mxu0 0.0
      %375 = vmatpush1.msra.mxu0 0.0
      %376 = vmatprep.subr.mxu0 0.0
      %377 = vmatpush1.msra.mxu0 0.0
      %378 = vmatprep.subr.mxu0 0.0
      %379 = vmatpush1.msra.mxu0 0.0
      %380 = vmatprep.subr.mxu0 0.0
      %381 = vmatpush1.msra.mxu0 0.0
      %382 = vmatprep.subr.mxu0 0.0
      %383 = vmatpush1.msra.mxu0 0.0
      %384 = vmatprep.subr.mxu0 0.0
      %385 = vmatpush1.msra.mxu0 0.0
      %386 = vmatprep.subr.mxu0 0.0
      %387 = vmatpush1.msra.mxu0 0.0
      %388 = vmatprep.subr.mxu0 0.0
      %389 = vmatpush1.msra.mxu0 0.0
      %390 = vmatprep.subr.mxu0 0.0
      %391 = vmatpush1.msra.mxu0 0.0
      %392 = vmatprep.subr.mxu0 0.0
      %393 = vmatpush1.msra.mxu0 0.0
      %394 = vmatprep.subr.mxu0 0.0
      %395 = vmatpush1.msra.mxu0 0.0
      %396 = vmatprep.subr.mxu0 0.0
      %397 = vmatpush1.msra.mxu0 0.0
      %398 = vmatprep.subr.mxu0 0.0
      %399 = vmatpush1.msra.mxu0 0.0
      %400 = vmatprep.subr.mxu0 0.0
      %401 = vmatpush1.msra.mxu0 0.0
      %402 = vmatprep.subr.mxu0 0.0
      %403 = vmatpush1.msra.mxu0 0.0
      %404 = vmatprep.subr.mxu0 0.0
      %405 = vmatpush1.msra.mxu0 0.0
      %406 = vmatprep.subr.mxu0 0.0
      %407 = vmatpush1.msra.mxu0 0.0
      %408 = vmatprep.subr.mxu0 0.0
      %409 = vmatpush1.msra.mxu0 0.0
      %410 = vmatprep.subr.mxu0 0.0
      %411 = vmatpush1.msra.mxu0 0.0
      %412 = vmatprep.subr.mxu0 0.0
      %413 = vmatpush1.msra.mxu0 0.0
      %414 = vmatprep.subr.mxu0 0.0
      %415 = vmatpush1.msra.mxu0 0.0
      %416 = vmatprep.subr.mxu0 0.0
      %417 = vmatpush1.msra.mxu0 0.0
      %418 = vmatprep.subr.mxu0 0.0
      %419 = vmatpush1.msra.mxu0 0.0
      %420 = vmatprep.subr.mxu0 0.0
      %421 = vmatpush1.msra.mxu0 0.0
      %422 = vmatprep.subr.mxu0 0.0
      %423 = vmatpush1.msra.mxu0 0.0
      %424 = vmatprep.subr.mxu0 0.0
      %425 = vmatpush1.msra.mxu0 0.0
      %426 = vmatprep.subr.mxu0 0.0
      %427 = vmatpush1.msra.mxu0 0.0
      %428 = vmatprep.subr.mxu0 0.0
      %429 = vmatpush1.msra.mxu0 0.0
      %430 = vmatprep.mubr.f32.mxu0 0.0
      %431 = vmatmul.mubr.f32.gmra.mrb[0].mxu0 %v319
      %v432 = vpop.f32.mrb[0].mxu0
      %v433 = vadd.f32 %v315, %v432
      %v434 = vpop.f32.mrb[0].mxu0
      %435 = vmatprep.mubr.f32.mxu0 0.0
      %436 = vmatmul.mubr.f32.gmra.mrb[0].mxu0 %v322
      %v437 = vpop.f32.mrb[0].mxu0
      %v438 = vadd.f32 %v315, %v437
      %v439 = vpop.f32.mrb[0].mxu0
      %440 = vmatprep.mubr.f32.mxu0 0.0
      %441 = vmatmul.mubr.f32.gmra.mrb[0].mxu0 %v325
      %v442 = vpop.f32.mrb[0].mxu0
      %v443 = vadd.f32 %v315, %v442
      %v444 = vpop.f32.mrb[0].mxu0
      %445 = vmatprep.mubr.f32.mxu0 0.0
      %446 = vmatmul.mubr.f32.gmra.mrb[0].mxu0 %v328
      %v447 = vpop.f32.mrb[0].mxu0
      %v448 = vadd.f32 %v315, %v447
      %v449 = vpop.f32.mrb[0].mxu0
      %450 = vmatprep.mubr.f32.mxu0 0.0
      %451 = vmatmul.mubr.f32.gmra.mrb[0].mxu0 %v331
      %v452 = vpop.f32.mrb[0].mxu0
      %v453 = vadd.f32 %v315, %v452
      %v454 = vpop.f32.mrb[0].mxu0
      %455 = vmatprep.mubr.f32.mxu0 0.0
      %456 = vmatmul.mubr.f32.gmra.mrb[0].mxu0 %v334
      %v457 = vpop.f32.mrb[0].mxu0
      %v458 = vadd.f32 %v315, %v457
      %v459 = vpop.f32.mrb[0].mxu0
      %460 = vmatprep.mubr.f32.mxu0 0.0
      %461 = vmatmul.mubr.f32.gmra.mrb[0].mxu0 %v337
      %v462 = vpop.f32.mrb[0].mxu0
      %v463 = vadd.f32 %v315, %v462
      %v464 = vpop.f32.mrb[0].mxu0
      %465 = vmatprep.mubr.f32.mxu0 0.0
      %466 = vmatmul.mubr.f32.gmra.mrb[0].mxu0 %v340
      %v467 = vpop.f32.mrb[0].mxu0
      %v468 = vadd.f32 %v315, %v467
      %v469 = vpop.f32.mrb[0].mxu0
      %470 = vmatprep.mubr.f32.mxu0 0.0
      %471 = vmatmul.mubr.f32.gmra.mrb[0].mxu0 %v343
      %v472 = vpop.f32.mrb[0].mxu0
      %v473 = vadd.f32 %v315, %v472
      %v474 = vpop.f32.mrb[0].mxu0
      %475 = vmatprep.mubr.f32.mxu0 0.0
      %476 = vmatmul.mubr.f32.gmra.mrb[0].mxu0 %v346
      %v477 = vpop.f32.mrb[0].mxu0
      %v478 = vadd.f32 %v315, %v477
      %v479 = vpop.f32.mrb[0].mxu0
      %480 = vmatprep.mubr.f32.mxu0 0.0
      %481 = vmatmul.mubr.f32.gmra.mrb[0].mxu0 %v349
      %v482 = vpop.f32.mrb[0].mxu0
      %v483 = vadd.f32 %v315, %v482
      %v484 = vpop.f32.mrb[0].mxu0
      %485 = vmatprep.mubr.f32.mxu0 0.0
      %486 = vmatmul.mubr.f32.gmra.mrb[0].mxu0 %v352
      %v487 = vpop.f32.mrb[0].mxu0
      %v488 = vadd.f32 %v315, %v487
      %v489 = vpop.f32.mrb[0].mxu0
      %490 = vmatprep.mubr.f32.mxu0 0.0
      %491 = vmatmul.mubr.f32.gmra.mrb[0].mxu0 %v355
      %v492 = vpop.f32.mrb[0].mxu0
      %v493 = vadd.f32 %v315, %v492
      %v494 = vpop.f32.mrb[0].mxu0
      %495 = vmatprep.mubr.f32.mxu0 0.0
      %496 = vmatmul.mubr.f32.gmra.mrb[0].mxu0 %v358
      %v497 = vpop.f32.mrb[0].mxu0
      %v498 = vadd.f32 %v315, %v497
      %v499 = vpop.f32.mrb[0].mxu0
      %500 = vmatprep.mubr.f32.mxu0 0.0
      %501 = vmatmul.mubr.f32.gmra.mrb[0].mxu0 %v361
      %v502 = vpop.f32.mrb[0].mxu0
      %v503 = vadd.f32 %v315, %v502
      %v504 = vpop.f32.mrb[0].mxu0
      %505 = vmatprep.mubr.f32.mxu0 0.0
      %506 = vmatmul.mubr.f32.gmra.mrb[0].mxu0 %v364
      %v507 = vpop.f32.mrb[0].mxu0
      %v508 = vadd.f32 %v315, %v507
      %v509 = vpop.f32.mrb[0].mxu0
      %510 = vdwg.mxu0
      %v511 = vxor.u32 %v433, 2147483648
      %v512 = vxor.u32 %v438, 2147483648
      %v513 = vxor.u32 %v443, 2147483648
      %v514 = vxor.u32 %v448, 2147483648
      %v515 = vxor.u32 %v453, 2147483648
      %v516 = vxor.u32 %v458, 2147483648
      %v517 = vxor.u32 %v463, 2147483648
      %v518 = vxor.u32 %v468, 2147483648
      %v519 = vxor.u32 %v473, 2147483648
      %v520 = vxor.u32 %v478, 2147483648
      %v521 = vxor.u32 %v483, 2147483648
      %v522 = vxor.u32 %v488, 2147483648
      %v523 = vxor.u32 %v493, 2147483648
      %v524 = vxor.u32 %v498, 2147483648
      %v525 = vxor.u32 %v503, 2147483648
      %v526 = vxor.u32 %v508, 2147483648
      %v527 = vmul.f32 %v511, 1.442695
      %v528 = vpow.pop %v527
      %v529 = vmul.f32 %v512, 1.442695
      %v530 = vpow.pop %v529
      %v531 = vmul.f32 %v513, 1.442695
      %v532 = vpow.pop %v531
      %v533 = vmul.f32 %v514, 1.442695
      %v534 = vpow.pop %v533
      %v535 = vmul.f32 %v515, 1.442695
      %v536 = vpow.pop %v535
      %v537 = vmul.f32 %v516, 1.442695
      %v538 = vpow.pop %v537
      %v539 = vmul.f32 %v517, 1.442695
      %v540 = vpow.pop %v539
      %v541 = vmul.f32 %v518, 1.442695
      %v542 = vpow.pop %v541
      %v543 = vmul.f32 %v519, 1.442695
      %v544 = vpow.pop %v543
      %v545 = vmul.f32 %v520, 1.442695
      %v546 = vpow.pop %v545
      %v547 = vmul.f32 %v521, 1.442695
      %v548 = vpow.pop %v547
      %v549 = vmul.f32 %v522, 1.442695
      %v550 = vpow.pop %v549
      %v551 = vmul.f32 %v523, 1.442695
      %v552 = vpow.pop %v551
      %v553 = vmul.f32 %v524, 1.442695
      %v554 = vpow.pop %v553
      %v555 = vmul.f32 %v525, 1.442695
      %v556 = vpow.pop %v555
      %v557 = vmul.f32 %v526, 1.442695
      %v558 = vpow.pop %v557
      %v559 = vadd.f32 %v528, 1.0
      %v560 = vadd.f32 %v530, 1.0
      %v561 = vadd.f32 %v532, 1.0
      %v562 = vadd.f32 %v534, 1.0
      %v563 = vadd.f32 %v536, 1.0
      %v564 = vadd.f32 %v538, 1.0
      %v565 = vadd.f32 %v540, 1.0
      %v566 = vadd.f32 %v542, 1.0
      %v567 = vadd.f32 %v544, 1.0
      %v568 = vadd.f32 %v546, 1.0
      %v569 = vadd.f32 %v548, 1.0
      %v570 = vadd.f32 %v550, 1.0
      %v571 = vadd.f32 %v552, 1.0
      %v572 = vadd.f32 %v554, 1.0
      %v573 = vadd.f32 %v556, 1.0
      %v574 = vadd.f32 %v558, 1.0
      %v575 = vrcp.pop %v559
      %v576 = vmul.f32 1.0, %v575
      %v577 = vrcp.pop %v560
      %v578 = vmul.f32 1.0, %v577
      %v579 = vrcp.pop %v561
      %v580 = vmul.f32 1.0, %v579
      %v581 = vrcp.pop %v562
      %v582 = vmul.f32 1.0, %v581
      %v583 = vrcp.pop %v563
      %v584 = vmul.f32 1.0, %v583
      %v585 = vrcp.pop %v564
      %v586 = vmul.f32 1.0, %v585
      %v587 = vrcp.pop %v565
      %v588 = vmul.f32 1.0, %v587
      %v589 = vrcp.pop %v566
      %v590 = vmul.f32 1.0, %v589
      %v591 = vrcp.pop %v567
      %v592 = vmul.f32 1.0, %v591
      %v593 = vrcp.pop %v568
      %v594 = vmul.f32 1.0, %v593
      %v595 = vrcp.pop %v569
      %v596 = vmul.f32 1.0, %v595
      %v597 = vrcp.pop %v570
      %v598 = vmul.f32 1.0, %v597
      %v599 = vrcp.pop %v571
      %v600 = vmul.f32 1.0, %v599
      %v601 = vrcp.pop %v572
      %v602 = vmul.f32 1.0, %v601
      %v603 = vrcp.pop %v573
      %v604 = vmul.f32 1.0, %v603
      %v605 = vrcp.pop %v574
      %v606 = vmul.f32 1.0, %v605
      %623 = vrot.lane.b32.xlu0 %v576, 112
      %v624 = vpop.permute.xlu0 %623
      %625 = vrot.lane.b32.xlu0 %v578, 112
      %v626 = vpop.permute.xlu0 %625
      %627 = vrot.lane.b32.xlu0 %v580, 112
      %v628 = vpop.permute.xlu0 %627
      %629 = vrot.lane.b32.xlu0 %v582, 112
      %v630 = vpop.permute.xlu0 %629
      %631 = vrot.lane.b32.xlu0 %v584, 112
      %v632 = vpop.permute.xlu0 %631
      %633 = vrot.lane.b32.xlu0 %v586, 112
      %v634 = vpop.permute.xlu0 %633
      %635 = vrot.lane.b32.xlu0 %v588, 112
      %v636 = vpop.permute.xlu0 %635
      %637 = vrot.lane.b32.xlu0 %v590, 112
      %v638 = vpop.permute.xlu0 %637
      %639 = vrot.lane.b32.xlu0 %v592, 112
      %v640 = vpop.permute.xlu0 %639
      %641 = vrot.lane.b32.xlu0 %v594, 112
      %v642 = vpop.permute.xlu0 %641
      %643 = vrot.lane.b32.xlu0 %v596, 112
      %v644 = vpop.permute.xlu0 %643
      %645 = vrot.lane.b32.xlu0 %v598, 112
      %v646 = vpop.permute.xlu0 %645
      %647 = vrot.lane.b32.xlu0 %v600, 112
      %v648 = vpop.permute.xlu0 %647
      %649 = vrot.lane.b32.xlu0 %v602, 112
      %v650 = vpop.permute.xlu0 %649
      %651 = vrot.lane.b32.xlu0 %v604, 112
      %v652 = vpop.permute.xlu0 %651
      %653 = vrot.lane.b32.xlu0 %v606, 112
      %v654 = vpop.permute.xlu0 %653
      %v671 = vsub.f32 %v576, %v624
      %v672 = vsub.f32 %v578, %v626
      %v673 = vsub.f32 %v580, %v628
      %v674 = vsub.f32 %v582, %v630
      %v675 = vsub.f32 %v584, %v632
      %v676 = vsub.f32 %v586, %v634
      %v677 = vsub.f32 %v588, %v636
      %v678 = vsub.f32 %v590, %v638
      %v679 = vsub.f32 %v592, %v640
      %v680 = vsub.f32 %v594, %v642
      %v681 = vsub.f32 %v596, %v644
      %v682 = vsub.f32 %v598, %v646
      %v683 = vsub.f32 %v600, %v648
      %v684 = vsub.f32 %v602, %v650
      %v685 = vsub.f32 %v604, %v652
      %v686 = vsub.f32 %v606, %v654
      %v687 = vmul.f32 %v671, 50.0
      %v688 = vmul.f32 %v672, 50.0
      %v689 = vmul.f32 %v673, 50.0
      %v690 = vmul.f32 %v674, 50.0
      %v691 = vmul.f32 %v675, 50.0
      %v692 = vmul.f32 %v676, 50.0
      %v693 = vmul.f32 %v677, 50.0
      %v694 = vmul.f32 %v678, 50.0
      %v695 = vmul.f32 %v679, 50.0
      %v696 = vmul.f32 %v680, 50.0
      %v697 = vmul.f32 %v681, 50.0
      %v698 = vmul.f32 %v682, 50.0
      %v699 = vmul.f32 %v683, 50.0
      %v700 = vmul.f32 %v684, 50.0
      %v701 = vmul.f32 %v685, 50.0
      %v702 = vmul.f32 %v686, 50.0
      %v703 = vxor.u32 %v687, 2147483648
      %v704 = vxor.u32 %v688, 2147483648
      %v705 = vxor.u32 %v689, 2147483648
      %v706 = vxor.u32 %v690, 2147483648
      %v707 = vxor.u32 %v691, 2147483648
      %v708 = vxor.u32 %v692, 2147483648
      %v709 = vxor.u32 %v693, 2147483648
      %v710 = vxor.u32 %v694, 2147483648
      %v711 = vxor.u32 %v695, 2147483648
      %v712 = vxor.u32 %v696, 2147483648
      %v713 = vxor.u32 %v697, 2147483648
      %v714 = vxor.u32 %v698, 2147483648
      %v715 = vxor.u32 %v699, 2147483648
      %v716 = vxor.u32 %v700, 2147483648
      %v717 = vxor.u32 %v701, 2147483648
      %v718 = vxor.u32 %v702, 2147483648
      %v719 = vmul.f32 %v703, 1.442695
      %v720 = vpow.pop %v719
      %v721 = vmul.f32 %v704, 1.442695
      %v722 = vpow.pop %v721
      %v723 = vmul.f32 %v705, 1.442695
      %v724 = vpow.pop %v723
      %v725 = vmul.f32 %v706, 1.442695
      %v726 = vpow.pop %v725
      %v727 = vmul.f32 %v707, 1.442695
      %v728 = vpow.pop %v727
      %v729 = vmul.f32 %v708, 1.442695
      %v730 = vpow.pop %v729
      %v731 = vmul.f32 %v709, 1.442695
      %v732 = vpow.pop %v731
      %v733 = vmul.f32 %v710, 1.442695
      %v734 = vpow.pop %v733
      %v735 = vmul.f32 %v711, 1.442695
      %v736 = vpow.pop %v735
      %v737 = vmul.f32 %v712, 1.442695
      %v738 = vpow.pop %v737
      %v739 = vmul.f32 %v713, 1.442695
      %v740 = vpow.pop %v739
      %v741 = vmul.f32 %v714, 1.442695
      %v742 = vpow.pop %v741
      %v743 = vmul.f32 %v715, 1.442695
      %v744 = vpow.pop %v743
      %v745 = vmul.f32 %v716, 1.442695
      %v746 = vpow.pop %v745
      %v747 = vmul.f32 %v717, 1.442695
      %v748 = vpow.pop %v747
      %v749 = vmul.f32 %v718, 1.442695
      %v750 = vpow.pop %v749
      %v751 = vadd.f32 %v720, 1.0
      %v752 = vadd.f32 %v722, 1.0
      %v753 = vadd.f32 %v724, 1.0
      %v754 = vadd.f32 %v726, 1.0
      %v755 = vadd.f32 %v728, 1.0
      %v756 = vadd.f32 %v730, 1.0
      %v757 = vadd.f32 %v732, 1.0
      %v758 = vadd.f32 %v734, 1.0
      %v759 = vadd.f32 %v736, 1.0
      %v760 = vadd.f32 %v738, 1.0
      %v761 = vadd.f32 %v740, 1.0
      %v762 = vadd.f32 %v742, 1.0
      %v763 = vadd.f32 %v744, 1.0
      %v764 = vadd.f32 %v746, 1.0
      %v765 = vadd.f32 %v748, 1.0
      %v766 = vadd.f32 %v750, 1.0
      %v767 = vrcp.pop %v751
      %v768 = vmul.f32 1.0, %v767
      %v769 = vrcp.pop %v752
      %v770 = vmul.f32 1.0, %v769
      %v771 = vrcp.pop %v753
      %v772 = vmul.f32 1.0, %v771
      %v773 = vrcp.pop %v754
      %v774 = vmul.f32 1.0, %v773
      %v775 = vrcp.pop %v755
      %v776 = vmul.f32 1.0, %v775
      %v777 = vrcp.pop %v756
      %v778 = vmul.f32 1.0, %v777
      %v779 = vrcp.pop %v757
      %v780 = vmul.f32 1.0, %v779
      %v781 = vrcp.pop %v758
      %v782 = vmul.f32 1.0, %v781
      %v783 = vrcp.pop %v759
      %v784 = vmul.f32 1.0, %v783
      %v785 = vrcp.pop %v760
      %v786 = vmul.f32 1.0, %v785
      %v787 = vrcp.pop %v761
      %v788 = vmul.f32 1.0, %v787
      %v789 = vrcp.pop %v762
      %v790 = vmul.f32 1.0, %v789
      %v791 = vrcp.pop %v763
      %v792 = vmul.f32 1.0, %v791
      %v793 = vrcp.pop %v764
      %v794 = vmul.f32 1.0, %v793
      %v795 = vrcp.pop %v765
      %v796 = vmul.f32 1.0, %v795
      %v797 = vrcp.pop %v766
      %v798 = vmul.f32 1.0, %v797
      %815 = vrot.lane.b32.xlu0 %v768, 32
      %v816 = vpop.permute.xlu0 %815
      %817 = vrot.lane.b32.xlu0 %v770, 32
      %v818 = vpop.permute.xlu0 %817
      %819 = vrot.lane.b32.xlu0 %v772, 32
      %v820 = vpop.permute.xlu0 %819
      %821 = vrot.lane.b32.xlu0 %v774, 32
      %v822 = vpop.permute.xlu0 %821
      %823 = vrot.lane.b32.xlu0 %v776, 32
      %v824 = vpop.permute.xlu0 %823
      %825 = vrot.lane.b32.xlu0 %v778, 32
      %v826 = vpop.permute.xlu0 %825
      %827 = vrot.lane.b32.xlu0 %v780, 32
      %v828 = vpop.permute.xlu0 %827
      %829 = vrot.lane.b32.xlu0 %v782, 32
      %v830 = vpop.permute.xlu0 %829
      %831 = vrot.lane.b32.xlu0 %v784, 32
      %v832 = vpop.permute.xlu0 %831
      %833 = vrot.lane.b32.xlu0 %v786, 32
      %v834 = vpop.permute.xlu0 %833
      %835 = vrot.lane.b32.xlu0 %v788, 32
      %v836 = vpop.permute.xlu0 %835
      %837 = vrot.lane.b32.xlu0 %v790, 32
      %v838 = vpop.permute.xlu0 %837
      %839 = vrot.lane.b32.xlu0 %v792, 32
      %v840 = vpop.permute.xlu0 %839
      %841 = vrot.lane.b32.xlu0 %v794, 32
      %v842 = vpop.permute.xlu0 %841
      %843 = vrot.lane.b32.xlu0 %v796, 32
      %v844 = vpop.permute.xlu0 %843
      %845 = vrot.lane.b32.xlu0 %v798, 32
      %v846 = vpop.permute.xlu0 %845
      %v863 = vsel %vm317, %v576, %v816
      %v864 = vsel %vm317, %v578, %v818
      %v865 = vsel %vm317, %v580, %v820
      %v866 = vsel %vm317, %v582, %v822
      %v867 = vsel %vm317, %v584, %v824
      %v868 = vsel %vm317, %v586, %v826
      %v869 = vsel %vm317, %v588, %v828
      %v870 = vsel %vm317, %v590, %v830
      %v871 = vsel %vm317, %v592, %v832
      %v872 = vsel %vm317, %v594, %v834
      %v873 = vsel %vm317, %v596, %v836
      %v874 = vsel %vm317, %v598, %v838
      %v875 = vsel %vm317, %v600, %v840
      %v876 = vsel %vm317, %v602, %v842
      %v877 = vsel %vm317, %v604, %v844
      %v878 = vsel %vm317, %v606, %v846
      %vm879 = vcmask 392192
      %880 = vst.msk [vmem:[%s226] sm:$0xff] %vm879, %v863
      %881 = vst.msk [vmem:[%s226 + $0x8] sm:$0xff] %vm879, %v864
      %882 = vst.msk [vmem:[%s226 + $0x10] sm:$0xff] %vm879, %v865
      %883 = vst.msk [vmem:[%s226 + $0x18] sm:$0xff] %vm879, %v866
      %884 = vst.msk [vmem:[%s226 + $0x20] sm:$0xff] %vm879, %v867
      %885 = vst.msk [vmem:[%s226 + $0x28] sm:$0xff] %vm879, %v868
      %886 = vst.msk [vmem:[%s226 + $0x30] sm:$0xff] %vm879, %v869
      %887 = vst.msk [vmem:[%s226 + $0x38] sm:$0xff] %vm879, %v870
      %888 = vst.msk [vmem:[%s226 + $0x40] sm:$0xff] %vm879, %v871
      %889 = vst.msk [vmem:[%s226 + $0x48] sm:$0xff] %vm879, %v872
      %890 = vst.msk [vmem:[%s226 + $0x50] sm:$0xff] %vm879, %v873
      %891 = vst.msk [vmem:[%s226 + $0x58] sm:$0xff] %vm879, %v874
      %892 = vst.msk [vmem:[%s226 + $0x60] sm:$0xff] %vm879, %v875
      %893 = vst.msk [vmem:[%s226 + $0x68] sm:$0xff] %vm879, %v876
      %894 = vst.msk [vmem:[%s226 + $0x70] sm:$0xff] %vm879, %v877
      %895 = vst.msk [vmem:[%s226 + $0x78] sm:$0xff] %vm879, %v878
      %s896 = smul.u32 16, %s16
      %p897 = scmp.lt.s32.totalorder %s896, 63
      %s898 = scalar_select %p897, %s896, 63
      %s899 = smul.addr %s898, 8
      %s900 = scalar_lea.vmem %s5, %s899
      // Predicated region
      $region41: #{db_head_forward.5} parent=39 // pred_check
        %p901 = pneg %p144
      $region42: #{db_head_forward.5} parent=39 // pred_check_branch
        %903 = sbr.rel (%p901) target = $region44
      $region43: #{db_head_forward.5} parent=39 // pred_region
        %s904 = smul.u32 16, %s16
      $region44: #{db_head_forward.5} parent=39 // pred_fallthru
        _
    $region40: #{db_head_forward.5} parent=5 // pred_fallthru
      _
    %p905 = scmp.le.s32.totalorder 2, %s11
    // Predicated region
    $region45: #{db_head_forward.5} parent=5 // pred_check
      %p906 = pneg %p905
    $region46: #{db_head_forward.5} parent=5 // pred_check_branch
      %908 = sbr.rel (%p906) target = $region48
    $region47: #{db_head_forward.5} parent=5 // pred_region
      %s909 = ssub.s32 %s11, 2
      // Predicated region
      $region49: #{db_head_forward.5} parent=47 // pred_check
        %p910 = pneg %p150
      $region50: #{db_head_forward.5} parent=47 // pred_check_branch
        %912 = sbr.rel (%p910) target = $region52
      $region51: #{db_head_forward.5} parent=47 // pred_region
        %s913 = smul.u32 16, %s17
        %p914 = scmp.lt.s32.totalorder %s913, 63
        %s915 = scalar_select %p914, %s913, 63
        %s916 = smul.addr %s915, 8
        %s917 = scalar_lea.vmem %s5, %s916
      $region52: #{db_head_forward.5} parent=47 // pred_fallthru
        _
    $region48: #{db_head_forward.5} parent=5 // pred_fallthru
      _
  $region6: #{db_head_forward.5} parent=0 // loop_footer
    %s15 = sadd.s32 1, %s11
  $region7: #{db_head_forward.5} parent=0 // loop_footer_branch
    %10 = sbr.rel target = $region3
  $region8: #{db_head_forward.5} parent=0 // loop_exit
    _

</llo_original>
